<compile_context>
chip_gen: v7x
topology: tpu7x:2x2x1
jax: 0.10.0
libtpu: 0.0.40
codegen_flags: <defaults>
</compile_context>

<pallas_src>
import math
from functools import partial

import jax
import jax.numpy as jnp
from jax.experimental import pallas as pl
from jax.experimental.pallas import tpu as pltpu


# ----------------------------- in-kernel helpers -----------------------------

def _layernorm(x, w, b, eps=1e-5):
    mu = jnp.mean(x, axis=-1, keepdims=True)
    xc = x - mu
    var = jnp.mean(xc * xc, axis=-1, keepdims=True)
    return xc * jax.lax.rsqrt(var + eps) * w + b


def _new_gelu(x):
    c = math.sqrt(2.0 / math.pi)
    return 0.5 * x * (1.0 + jnp.tanh(c * (x + 0.044715 * x * x * x)))


# ----------------------------- fused block kernel ----------------------------

def _block_kernel(x_ref, mask_ref,
                  ln1_w_ref, ln1_b_ref,
                  wq_ref, wk_ref, wv_ref, bq_ref, bk_ref, bv_ref,
                  proj_w_ref, proj_b_ref,
                  ln2_w_ref, ln2_b_ref,
                  fc_w_ref, fc_b_ref, fcp_w_ref, fcp_b_ref,
                  xo_ref, ko_ref, vo_ref,
                  *, n_head, head_dim):
    C = n_head * head_dim
    x = x_ref[...]                                   # (B*T, C) f32 residual
    BT = x.shape[0]

    # ---- ln1 + q/k/v projections (bf16 operands, f32 accumulation) ----------
    h1 = _layernorm(x, ln1_w_ref[...], ln1_b_ref[...]).astype(jnp.bfloat16)
    q = jnp.dot(h1, wq_ref[...], preferred_element_type=jnp.float32) + bq_ref[...]
    k = jnp.dot(h1, wk_ref[...], preferred_element_type=jnp.float32) + bk_ref[...]
    v = jnp.dot(h1, wv_ref[...], preferred_element_type=jnp.float32) + bv_ref[...]

    # present k/v written lane-dense as (B*T, C); head relayout happens once
    # outside the kernel.
    ko_ref[...] = k
    vo_ref[...] = v

    # ---- multi-head attention (lane-dense, per-head lane masks) -------------
    scale = 1.0 / math.sqrt(head_dim)
    add_mask = mask_ref[...]                         # (BT, BT): 0 or -inf
    q16 = q.astype(jnp.bfloat16)
    k16 = k.astype(jnp.bfloat16)
    v16 = v.astype(jnp.bfloat16)
    lane = jax.lax.broadcasted_iota(jnp.int32, (1, C), 1)

    y = jnp.zeros((BT, C), jnp.float32)
    for h in range(n_head):
        sel = (lane >= h * head_dim) & (lane < (h + 1) * head_dim)
        hmask = sel.astype(jnp.bfloat16)             # (1, C) 0/1 head selector
        # Contract over all C with other heads' k-lanes zeroed: exactly equals
        # the per-head (T, hd) matmul, no lane slicing / transposes needed.
        s = jax.lax.dot_general(q16, k16 * hmask, (((1,), (1,)), ((), ())),
                                preferred_element_type=jnp.float32)
        s = s * scale + add_mask                     # causal + batch blocks
        s = s - jnp.max(s, axis=-1, keepdims=True)
        p = jnp.exp(s)
        p = p * pl.reciprocal(jnp.sum(p, axis=-1, keepdims=True), approx=True)
        # p @ (v * mask) lands only on this head's lanes; accumulate heads.
        y = y + jnp.dot(p.astype(jnp.bfloat16), v16 * hmask,
                        preferred_element_type=jnp.float32)

    # ---- attention output projection + residual -----------------------------
    y = jnp.dot(y.astype(jnp.bfloat16), proj_w_ref[...],
                preferred_element_type=jnp.float32) + proj_b_ref[...]
    x = x + y

    # ---- ln2 + MLP (new_gelu) + residual -------------------------------------
    h2 = _layernorm(x, ln2_w_ref[...], ln2_b_ref[...]).astype(jnp.bfloat16)
    m = jnp.dot(h2, fc_w_ref[...], preferred_element_type=jnp.float32) + fc_b_ref[...]
    m = _new_gelu(m).astype(jnp.bfloat16)
    m = jnp.dot(m, fcp_w_ref[...], preferred_element_type=jnp.float32) + fcp_b_ref[...]

    xo_ref[...] = x + m


def transformer_block(x, attn_mask, blk, n_head):
    BT, C = x.shape
    kern = partial(_block_kernel, n_head=n_head, head_dim=C // n_head)
    arg_order = [
        ("x", x), ("mask", attn_mask),
        ("ln1_w", blk["ln1_w"]), ("ln1_b", blk["ln1_b"]),
        ("wq", blk["wq"]), ("wk", blk["wk"]), ("wv", blk["wv"]),
        ("bq", blk["bq"]), ("bk", blk["bk"]), ("bv", blk["bv"]),
        ("proj_w", blk["proj_w"]), ("proj_b", blk["proj_b"]),
        ("ln2_w", blk["ln2_w"]), ("ln2_b", blk["ln2_b"]),
        ("fc_w", blk["fc_w"]), ("fc_b", blk["fc_b"]),
        ("fcp_w", blk["fcp_w"]), ("fcp_b", blk["fcp_b"]),
    ]
    args = [a for _, a in arg_order]
    in_specs = [pl.BlockSpec(a.shape, lambda i: (0, 0)) for a in args]
    out_sds = (jax.ShapeDtypeStruct((BT, C), jnp.float32),) * 3
    out_specs = tuple(pl.BlockSpec((BT, C), lambda i: (0, 0)) for _ in range(3))
    fn = pl.pallas_call(
        kern,
        out_shape=out_sds,
        grid=(1,),
        in_specs=in_specs,
        out_specs=out_specs,
        compiler_params=pltpu.CompilerParams(dimension_semantics=("arbitrary",)),
    )
    return fn(*args)                                  # (x_out, k, v)


# ----------------------------- final ln_f + lm_head --------------------------

def _final_kernel(x_ref, lnf_w_ref, lnf_b_ref, wte_t_ref, o_ref):
    h = _layernorm(x_ref[...], lnf_w_ref[...], lnf_b_ref[...])
    o_ref[...] = jnp.dot(h.astype(jnp.bfloat16), wte_t_ref[...],
                         preferred_element_type=jnp.float32)


def lm_head_last(x_last, lnf_w, lnf_b, wte_t):
    B, C = x_last.shape
    V = wte_t.shape[1]
    fn = pl.pallas_call(
        _final_kernel,
        out_shape=jax.ShapeDtypeStruct((B, V), jnp.float32),
        grid=(1,),
        in_specs=[pl.BlockSpec((B, C), lambda i: (0, 0)),
                  pl.BlockSpec((1, C), lambda i: (0, 0)),
                  pl.BlockSpec((1, C), lambda i: (0, 0)),
                  pl.BlockSpec((C, V), lambda i: (0, 0))],
        out_specs=pl.BlockSpec((B, V), lambda i: (0, 0)),
        compiler_params=pltpu.CompilerParams(dimension_semantics=("arbitrary",)),
    )
    return fn(x_last, lnf_w, lnf_b, wte_t)


# ----------------------------- model (glue) ----------------------------------

class Config:
    vocab_size = 64
    block_size = 16
    n_layer = 2
    n_head = 4
    n_embd = 32
    dropout = 0.0        # eval / p=0 -> dropout is identity
    bias = True
    causal = True


def init_params(cfg, key):
    """Params are stored kernel-ready: matmul weights in bf16 (cast once, not
    per forward), qkv split into wq/wk/wv, biases/LN params as (1, C) f32,
    tied lm_head weight pre-transposed to (C, V) bf16."""
    std = 0.02
    C = cfg.n_embd
    f32, bf16 = jnp.float32, jnp.bfloat16
    ks = jax.random.split(key, 2 + 6 * cfg.n_layer)
    it = iter(ks)

    wte = (jax.random.normal(next(it), (cfg.vocab_size, C)) * std).astype(f32)
    wpe = (jax.random.normal(next(it), (cfg.block_size, C)) * std).astype(f32)
    params = {
        "wte": wte,
        "wpe": wpe,
        "wte_t": wte.T.astype(bf16),                 # tied lm_head weight
        "ln_f_w": jnp.ones((1, C), f32),
        "ln_f_b": jnp.zeros((1, C), f32),
        "blocks": [],
    }
    for _ in range(cfg.n_layer):
        attn_w = jax.random.normal(next(it), (C, 3 * C)) * std   # (in, out)
        attn_b = jax.random.normal(next(it), (3 * C,)) * std
        blk = {
            "ln1_w": jnp.ones((1, C), f32),
            "ln1_b": jnp.zeros((1, C), f32),
            "wq": attn_w[:, :C].astype(bf16),
            "wk": attn_w[:, C:2 * C].astype(bf16),
            "wv": attn_w[:, 2 * C:].astype(bf16),
            "bq": attn_b[:C].reshape(1, C).astype(f32),
            "bk": attn_b[C:2 * C].reshape(1, C).astype(f32),
            "bv": attn_b[2 * C:].reshape(1, C).astype(f32),
            "proj_w": (jax.random.normal(next(it), (C, C)) * std).astype(bf16),
            "proj_b": (jax.random.normal(next(it), (C,)) * std).reshape(1, C).astype(f32),
            "ln2_w": jnp.ones((1, C), f32),
            "ln2_b": jnp.zeros((1, C), f32),
            "fc_w": (jax.random.normal(next(it), (C, 4 * C)) * std).astype(bf16),
            "fc_b": jnp.zeros((1, 4 * C), f32),
            "fcp_w": (jax.random.normal(next(it), (4 * C, C)) * std).astype(bf16),
            "fcp_b": jnp.zeros((1, C), f32),
        }
        params["blocks"].append(blk)
    return params


def gpt_forward(params, input_ids, cfg):
    B, T = input_ids.shape
    C, H = cfg.n_embd, cfg.n_head
    hd = C // H
    BT = B * T
    assert T <= cfg.block_size

    # Embedding gather stays in XLA (data-dependent gather; pure glue here).
    pos = jnp.arange(T)
    x = params["wte"][input_ids] + params["wpe"][pos][None, :, :]
    x = x.reshape(BT, C).astype(jnp.float32)         # dropout p=0 -> identity

    # Additive attention mask (0 / -inf), built once: causal within a sequence
    # plus block-diagonal across the batch (tokens are flattened to B*T rows).
    idx = jnp.arange(BT)
    allowed = (idx[:, None] // T) == (idx[None, :] // T)
    if cfg.causal:
        allowed = allowed & ((idx[None, :] % T) <= (idx[:, None] % T))
    attn_mask = jnp.where(allowed, 0.0, -jnp.inf).astype(jnp.float32)

    presents = []
    for blk in params["blocks"]:
        x, k, v = transformer_block(x, attn_mask, blk, H)
        # NOTE: att_entropy is computed-then-discarded in the reference GPT
        # forward; it does not affect any returned value, so it is skipped.
        k4 = k.reshape(B, T, H, hd).transpose(0, 2, 1, 3)   # (B, H, T, hd)
        v4 = v.reshape(B, T, H, hd).transpose(0, 2, 1, 3)
        presents.append(jnp.stack([k4, v4]))                # (2, B, H, T, hd)
    present = jnp.stack(presents)                           # (L, 2, B, H, T, hd)

    # ln_f + tied lm_head on the last token only (ln_f is per-row).
    x_last = x.reshape(B, T, C)[:, -1, :]                   # (B, C)
    logits = lm_head_last(x_last, params["ln_f_w"], params["ln_f_b"],
                          params["wte_t"])                  # (B, V)
    return logits.reshape(B, 1, cfg.vocab_size), present


if __name__ == "__main__":
    cfg = Config()
    key = jax.random.PRNGKey(0)
    k_param, k_ids = jax.random.split(key)
    params = init_params(cfg, k_param)

    B, T = 2, 8
    input_ids = jax.random.randint(k_ids, (B, T), 0, cfg.vocab_size,
                                   dtype=jnp.int32)

    fwd = jax.jit(lambda p, ids: gpt_forward(p, ids, cfg))
    logits, present = fwd(params, input_ids)
    jax.block_until_ready(logits)
    jax.block_until_ready(present)

    assert logits.shape == (B, 1, cfg.vocab_size)
    assert present.shape == (cfg.n_layer, 2, B, cfg.n_head, T,
                             cfg.n_embd // cfg.n_head)
    print("KERNEL_OK")
</pallas_src>

<mosaic_0001>
module attributes {stable_mosaic.version = 11 : i64} {
  func.func @_final_kernel(%arg0: i32, %arg1: memref<2x32xf32, #tpu.memory_space<vmem>>, %arg2: memref<1x32xf32, #tpu.memory_space<vmem>>, %arg3: memref<1x32xf32, #tpu.memory_space<vmem>>, %arg4: memref<32x64xbf16, #tpu.memory_space<vmem>>, %arg5: memref<2x64xf32, #tpu.memory_space<vmem>>) attributes {dimension_semantics = [#tpu.dimension_semantics<arbitrary>], iteration_bounds = array<i64: 1>, scalar_prefetch = 0 : i64, scratch_operands = 0 : i64, tpu.core_type = #tpu.core_type<tc>, window_params = [{pipeline_mode = #tpu.pipeline_mode<synchronous>, transform_indices = @transform_0, window_bounds = array<i64: 2, 32>}, {pipeline_mode = #tpu.pipeline_mode<synchronous>, transform_indices = @transform_1, window_bounds = array<i64: 1, 32>}, {pipeline_mode = #tpu.pipeline_mode<synchronous>, transform_indices = @transform_2, window_bounds = array<i64: 1, 32>}, {pipeline_mode = #tpu.pipeline_mode<synchronous>, transform_indices = @transform_3, window_bounds = array<i64: 32, 64>}, {pipeline_mode = #tpu.pipeline_mode<synchronous>, transform_indices = @transform_4, window_bounds = array<i64: 2, 64>}]} {
    %c0 = arith.constant 0 : index
    %c0_0 = arith.constant 0 : index
    %0 = vector.load %arg1[%c0, %c0_0] : memref<2x32xf32, #tpu.memory_space<vmem>>, vector<2x32xf32>
    %c0_1 = arith.constant 0 : index
    %c0_2 = arith.constant 0 : index
    %1 = vector.load %arg2[%c0_1, %c0_2] : memref<1x32xf32, #tpu.memory_space<vmem>>, vector<1x32xf32>
    %c0_3 = arith.constant 0 : index
    %c0_4 = arith.constant 0 : index
    %2 = vector.load %arg3[%c0_3, %c0_4] : memref<1x32xf32, #tpu.memory_space<vmem>>, vector<1x32xf32>
    %cst = arith.constant dense<0.000000e+00> : vector<2xf32>
    %3 = vector.multi_reduction <add>, %0, %cst [1] : vector<2x32xf32> to vector<2xf32>
    %4 = vector.shape_cast %3 : vector<2xf32> to vector<2x1xf32>
    %cst_5 = arith.constant 3.200000e+01 : f32
    %5 = vector.broadcast %cst_5 : f32 to vector<2x1xf32>
    %6 = arith.divf %4, %5 : vector<2x1xf32>
    %7 = vector.broadcast %6 : vector<2x1xf32> to vector<2x32xf32>
    %8 = arith.subf %0, %7 : vector<2x32xf32>
    %9 = arith.mulf %8, %8 : vector<2x32xf32>
    %cst_6 = arith.constant dense<0.000000e+00> : vector<2xf32>
    %10 = vector.multi_reduction <add>, %9, %cst_6 [1] : vector<2x32xf32> to vector<2xf32>
    %11 = vector.shape_cast %10 : vector<2xf32> to vector<2x1xf32>
    %cst_7 = arith.constant 3.200000e+01 : f32
    %12 = vector.broadcast %cst_7 : f32 to vector<2x1xf32>
    %13 = arith.divf %11, %12 : vector<2x1xf32>
    %cst_8 = arith.constant 9.99999974E-6 : f32
    %14 = vector.broadcast %cst_8 : f32 to vector<2x1xf32>
    %15 = arith.addf %13, %14 : vector<2x1xf32>
    %16 = math.rsqrt %15 : vector<2x1xf32>
    %17 = vector.broadcast %16 : vector<2x1xf32> to vector<2x32xf32>
    %18 = arith.mulf %8, %17 : vector<2x32xf32>
    %19 = vector.broadcast %1 : vector<1x32xf32> to vector<2x32xf32>
    %20 = arith.mulf %18, %19 : vector<2x32xf32>
    %21 = vector.broadcast %2 : vector<1x32xf32> to vector<2x32xf32>
    %22 = arith.addf %20, %21 : vector<2x32xf32>
    %23 = arith.truncf %22 : vector<2x32xf32> to vector<2x32xbf16>
    %c0_9 = arith.constant 0 : index
    %c0_10 = arith.constant 0 : index
    %24 = vector.load %arg4[%c0_9, %c0_10] : memref<32x64xbf16, #tpu.memory_space<vmem>>, vector<32x64xbf16>
    %cst_11 = arith.constant dense<0.000000e+00> : vector<2x64xf32>
    %25 = tpu.matmul %23, %24, %cst_11 {dimension_numbers = #tpu.dot_dimension_numbers<[1], [0], [0], [1], [0, 0, 1, 1], [], []>} : vector<2x32xbf16>, vector<32x64xbf16>, vector<2x64xf32> -> vector<2x64xf32>
    %c0_12 = arith.constant 0 : index
    %c0_13 = arith.constant 0 : index
    %26 = vector.load %arg5[%c0_12, %c0_13] : memref<2x64xf32, #tpu.memory_space<vmem>>, vector<2x64xf32>
    tpu.vector_store %arg5[%c0_12, %c0_13], %25 {strides = array<i32>} : memref<2x64xf32, #tpu.memory_space<vmem>>, vector<2x64xf32>,
    return
  }
  func.func @transform_0(%arg0: i32) -> (i32, i32) {
    %c0_i32 = arith.constant 0 : i32
    %c0_i32_0 = arith.constant 0 : i32
    %c0_i32_1 = arith.constant 0 : i32
    return %c0_i32, %c0_i32_0 : i32, i32
  }
  func.func @transform_1(%arg0: i32) -> (i32, i32) {
    %c0_i32 = arith.constant 0 : i32
    %c0_i32_0 = arith.constant 0 : i32
    %c0_i32_1 = arith.constant 0 : i32
    return %c0_i32, %c0_i32_0 : i32, i32
  }
  func.func @transform_2(%arg0: i32) -> (i32, i32) {
    %c0_i32 = arith.constant 0 : i32
    %c0_i32_0 = arith.constant 0 : i32
    %c0_i32_1 = arith.constant 0 : i32
    return %c0_i32, %c0_i32_0 : i32, i32
  }
  func.func @transform_3(%arg0: i32) -> (i32, i32) {
    %c0_i32 = arith.constant 0 : i32
    %c0_i32_0 = arith.constant 0 : i32
    %c0_i32_1 = arith.constant 0 : i32
    return %c0_i32, %c0_i32_0 : i32, i32
  }
  func.func @transform_4(%arg0: i32) -> (i32, i32) {
    %c0_i32 = arith.constant 0 : i32
    %c0_i32_0 = arith.constant 0 : i32
    %c0_i32_1 = arith.constant 0 : i32
    return %c0_i32, %c0_i32_0 : i32, i32
  }
}

module attributes {stable_mosaic.version = 11 : i64} {
  func.func @_block_kernel(%arg0: i32, %arg1: memref<16x32xf32, #tpu.memory_space<vmem>>, %arg2: memref<16x16xf32, #tpu.memory_space<vmem>>, %arg3: memref<1x32xf32, #tpu.memory_space<vmem>>, %arg4: memref<1x32xf32, #tpu.memory_space<vmem>>, %arg5: memref<32x32xbf16, #tpu.memory_space<vmem>>, %arg6: memref<32x32xbf16, #tpu.memory_space<vmem>>, %arg7: memref<32x32xbf16, #tpu.memory_space<vmem>>, %arg8: memref<1x32xf32, #tpu.memory_space<vmem>>, %arg9: memref<1x32xf32, #tpu.memory_space<vmem>>, %arg10: memref<1x32xf32, #tpu.memory_space<vmem>>, %arg11: memref<32x32xbf16, #tpu.memory_space<vmem>>, %arg12: memref<1x32xf32, #tpu.memory_space<vmem>>, %arg13: memref<1x32xf32, #tpu.memory_space<vmem>>, %arg14: memref<1x32xf32, #tpu.memory_space<vmem>>, %arg15: memref<32x128xbf16, #tpu.memory_space<vmem>>, %arg16: memref<1x128xf32, #tpu.memory_space<vmem>>, %arg17: memref<128x32xbf16, #tpu.memory_space<vmem>>, %arg18: memref<1x32xf32, #tpu.memory_space<vmem>>, %arg19: memref<16x32xf32, #tpu.memory_space<vmem>>, %arg20: memref<16x32xf32, #tpu.memory_space<vmem>>, %arg21: memref<16x32xf32, #tpu.memory_space<vmem>>) attributes {dimension_semantics = [#tpu.dimension_semantics<arbitrary>], iteration_bounds = array<i64: 1>, scalar_prefetch = 0 : i64, scratch_operands = 0 : i64, tpu.core_type = #tpu.core_type<tc>, window_params = [{pipeline_mode = #tpu.pipeline_mode<synchronous>, transform_indices = @transform_0, window_bounds = array<i64: 16, 32>}, {pipeline_mode = #tpu.pipeline_mode<synchronous>, transform_indices = @transform_1, window_bounds = array<i64: 16, 16>}, {pipeline_mode = #tpu.pipeline_mode<synchronous>, transform_indices = @transform_2, window_bounds = array<i64: 1, 32>}, {pipeline_mode = #tpu.pipeline_mode<synchronous>, transform_indices = @transform_3, window_bounds = array<i64: 1, 32>}, {pipeline_mode = #tpu.pipeline_mode<synchronous>, transform_indices = @transform_4, window_bounds = array<i64: 32, 32>}, {pipeline_mode = #tpu.pipeline_mode<synchronous>, transform_indices = @transform_5, window_bounds = array<i64: 32, 32>}, {pipeline_mode = #tpu.pipeline_mode<synchronous>, transform_indices = @transform_6, window_bounds = array<i64: 32, 32>}, {pipeline_mode = #tpu.pipeline_mode<synchronous>, transform_indices = @transform_7, window_bounds = array<i64: 1, 32>}, {pipeline_mode = #tpu.pipeline_mode<synchronous>, transform_indices = @transform_8, window_bounds = array<i64: 1, 32>}, {pipeline_mode = #tpu.pipeline_mode<synchronous>, transform_indices = @transform_9, window_bounds = array<i64: 1, 32>}, {pipeline_mode = #tpu.pipeline_mode<synchronous>, transform_indices = @transform_10, window_bounds = array<i64: 32, 32>}, {pipeline_mode = #tpu.pipeline_mode<synchronous>, transform_indices = @transform_11, window_bounds = array<i64: 1, 32>}, {pipeline_mode = #tpu.pipeline_mode<synchronous>, transform_indices = @transform_12, window_bounds = array<i64: 1, 32>}, {pipeline_mode = #tpu.pipeline_mode<synchronous>, transform_indices = @transform_13, window_bounds = array<i64: 1, 32>}, {pipeline_mode = #tpu.pipeline_mode<synchronous>, transform_indices = @transform_14, window_bounds = array<i64: 32, 128>}, {pipeline_mode = #tpu.pipeline_mode<synchronous>, transform_indices = @transform_15, window_bounds = array<i64: 1, 128>}, {pipeline_mode = #tpu.pipeline_mode<synchronous>, transform_indices = @transform_16, window_bounds = array<i64: 128, 32>}, {pipeline_mode = #tpu.pipeline_mode<synchronous>, transform_indices = @transform_17, window_bounds = array<i64: 1, 32>}, {pipeline_mode = #tpu.pipeline_mode<synchronous>, transform_indices = @transform_18, window_bounds = array<i64: 16, 32>}, {pipeline_mode = #tpu.pipeline_mode<synchronous>, transform_indices = @transform_19, window_bounds = array<i64: 16, 32>}, {pipeline_mode = #tpu.pipeline_mode<synchronous>, transform_indices = @transform_20, window_bounds = array<i64: 16, 32>}]} {
    %c0 = arith.constant 0 : index
    %c0_0 = arith.constant 0 : index
    %0 = vector.load %arg1[%c0, %c0_0] : memref<16x32xf32, #tpu.memory_space<vmem>>, vector<16x32xf32>
    %c0_1 = arith.constant 0 : index
    %c0_2 = arith.constant 0 : index
    %1 = vector.load %arg3[%c0_1, %c0_2] : memref<1x32xf32, #tpu.memory_space<vmem>>, vector<1x32xf32>
    %c0_3 = arith.constant 0 : index
    %c0_4 = arith.constant 0 : index
    %2 = vector.load %arg4[%c0_3, %c0_4] : memref<1x32xf32, #tpu.memory_space<vmem>>, vector<1x32xf32>
    %cst = arith.constant dense<0.000000e+00> : vector<16xf32>
    %3 = vector.multi_reduction <add>, %0, %cst [1] : vector<16x32xf32> to vector<16xf32>
    %4 = vector.shape_cast %3 : vector<16xf32> to vector<16x1xf32>
    %cst_5 = arith.constant 3.200000e+01 : f32
    %5 = vector.broadcast %cst_5 : f32 to vector<16x1xf32>
    %6 = arith.divf %4, %5 : vector<16x1xf32>
    %7 = vector.broadcast %6 : vector<16x1xf32> to vector<16x32xf32>
    %8 = arith.subf %0, %7 : vector<16x32xf32>
    %9 = arith.mulf %8, %8 : vector<16x32xf32>
    %cst_6 = arith.constant dense<0.000000e+00> : vector<16xf32>
    %10 = vector.multi_reduction <add>, %9, %cst_6 [1] : vector<16x32xf32> to vector<16xf32>
    %11 = vector.shape_cast %10 : vector<16xf32> to vector<16x1xf32>
    %cst_7 = arith.constant 3.200000e+01 : f32
    %12 = vector.broadcast %cst_7 : f32 to vector<16x1xf32>
    %13 = arith.divf %11, %12 : vector<16x1xf32>
    %cst_8 = arith.constant 9.99999974E-6 : f32
    %14 = vector.broadcast %cst_8 : f32 to vector<16x1xf32>
    %15 = arith.addf %13, %14 : vector<16x1xf32>
    %16 = math.rsqrt %15 : vector<16x1xf32>
    %17 = vector.broadcast %16 : vector<16x1xf32> to vector<16x32xf32>
    %18 = arith.mulf %8, %17 : vector<16x32xf32>
    %19 = vector.broadcast %1 : vector<1x32xf32> to vector<16x32xf32>
    %20 = arith.mulf %18, %19 : vector<16x32xf32>
    %21 = vector.broadcast %2 : vector<1x32xf32> to vector<16x32xf32>
    %22 = arith.addf %20, %21 : vector<16x32xf32>
    %23 = arith.truncf %22 : vector<16x32xf32> to vector<16x32xbf16>
    %c0_9 = arith.constant 0 : index
    %c0_10 = arith.constant 0 : index
    %24 = vector.load %arg5[%c0_9, %c0_10] : memref<32x32xbf16, #tpu.memory_space<vmem>>, vector<32x32xbf16>
    %cst_11 = arith.constant dense<0.000000e+00> : vector<16x32xf32>
    %25 = tpu.matmul %23, %24, %cst_11 {dimension_numbers = #tpu.dot_dimension_numbers<[1], [0], [0], [1], [0, 0, 1, 1], [], []>} : vector<16x32xbf16>, vector<32x32xbf16>, vector<16x32xf32> -> vector<16x32xf32>
    %c0_12 = arith.constant 0 : index
    %c0_13 = arith.constant 0 : index
    %26 = vector.load %arg8[%c0_12, %c0_13] : memref<1x32xf32, #tpu.memory_space<vmem>>, vector<1x32xf32>
    %27 = vector.broadcast %26 : vector<1x32xf32> to vector<16x32xf32>
    %28 = arith.addf %25, %27 : vector<16x32xf32>
    %c0_14 = arith.constant 0 : index
    %c0_15 = arith.constant 0 : index
    %29 = vector.load %arg6[%c0_14, %c0_15] : memref<32x32xbf16, #tpu.memory_space<vmem>>, vector<32x32xbf16>
    %cst_16 = arith.constant dense<0.000000e+00> : vector<16x32xf32>
    %30 = tpu.matmul %23, %29, %cst_16 {dimension_numbers = #tpu.dot_dimension_numbers<[1], [0], [0], [1], [0, 0, 1, 1], [], []>} : vector<16x32xbf16>, vector<32x32xbf16>, vector<16x32xf32> -> vector<16x32xf32>
    %c0_17 = arith.constant 0 : index
    %c0_18 = arith.constant 0 : index
    %31 = vector.load %arg9[%c0_17, %c0_18] : memref<1x32xf32, #tpu.memory_space<vmem>>, vector<1x32xf32>
    %32 = vector.broadcast %31 : vector<1x32xf32> to vector<16x32xf32>
    %33 = arith.addf %30, %32 : vector<16x32xf32>
    %c0_19 = arith.constant 0 : index
    %c0_20 = arith.constant 0 : index
    %34 = vector.load %arg7[%c0_19, %c0_20] : memref<32x32xbf16, #tpu.memory_space<vmem>>, vector<32x32xbf16>
    %cst_21 = arith.constant dense<0.000000e+00> : vector<16x32xf32>
    %35 = tpu.matmul %23, %34, %cst_21 {dimension_numbers = #tpu.dot_dimension_numbers<[1], [0], [0], [1], [0, 0, 1, 1], [], []>} : vector<16x32xbf16>, vector<32x32xbf16>, vector<16x32xf32> -> vector<16x32xf32>
    %c0_22 = arith.constant 0 : index
    %c0_23 = arith.constant 0 : index
    %36 = vector.load %arg10[%c0_22, %c0_23] : memref<1x32xf32, #tpu.memory_space<vmem>>, vector<1x32xf32>
    %37 = vector.broadcast %36 : vector<1x32xf32> to vector<16x32xf32>
    %38 = arith.addf %35, %37 : vector<16x32xf32>
    %c0_24 = arith.constant 0 : index
    %c0_25 = arith.constant 0 : index
    %39 = vector.load %arg20[%c0_24, %c0_25] : memref<16x32xf32, #tpu.memory_space<vmem>>, vector<16x32xf32>
    tpu.vector_store %arg20[%c0_24, %c0_25], %33 {strides = array<i32>} : memref<16x32xf32, #tpu.memory_space<vmem>>, vector<16x32xf32>,
    %c0_26 = arith.constant 0 : index
    %c0_27 = arith.constant 0 : index
    %40 = vector.load %arg21[%c0_26, %c0_27] : memref<16x32xf32, #tpu.memory_space<vmem>>, vector<16x32xf32>
    tpu.vector_store %arg21[%c0_26, %c0_27], %38 {strides = array<i32>} : memref<16x32xf32, #tpu.memory_space<vmem>>, vector<16x32xf32>,
    %c0_28 = arith.constant 0 : index
    %c0_29 = arith.constant 0 : index
    %41 = vector.load %arg2[%c0_28, %c0_29] : memref<16x16xf32, #tpu.memory_space<vmem>>, vector<16x16xf32>
    %42 = arith.truncf %28 : vector<16x32xf32> to vector<16x32xbf16>
    %43 = arith.truncf %33 : vector<16x32xf32> to vector<16x32xbf16>
    %44 = arith.truncf %38 : vector<16x32xf32> to vector<16x32xbf16>
    %45 = tpu.iota {dimensions = array<i32: 1>} : vector<1x32xi32>
    %cst_30 = arith.constant 0.000000e+00 : f32
    %46 = vector.broadcast %cst_30 : f32 to vector<16x32xf32>
    %c0_i32 = arith.constant 0 : i32
    %47 = vector.broadcast %c0_i32 : i32 to vector<1x32xi32>
    %48 = arith.cmpi sge, %45, %47 : vector<1x32xi32>
    %c8_i32 = arith.constant 8 : i32
    %49 = vector.broadcast %c8_i32 : i32 to vector<1x32xi32>
    %50 = arith.cmpi slt, %45, %49 : vector<1x32xi32>
    %51 = arith.andi %48, %50 : vector<1x32xi1>
    %52 = arith.extui %51 : vector<1x32xi1> to vector<1x32xi32>
    %53 = arith.sitofp %52 : vector<1x32xi32> to vector<1x32xf32>
    %54 = arith.truncf %53 : vector<1x32xf32> to vector<1x32xbf16>
    %55 = vector.broadcast %54 : vector<1x32xbf16> to vector<16x32xbf16>
    %56 = arith.mulf %43, %55 : vector<16x32xbf16>
    %cst_31 = arith.constant dense<0.000000e+00> : vector<16x16xf32>
    %57 = tpu.matmul %42, %56, %cst_31 {dimension_numbers = #tpu.dot_dimension_numbers<[1], [1], [0], [0], [0, 0, 1, 0], [], []>} : vector<16x32xbf16>, vector<16x32xbf16>, vector<16x16xf32> -> vector<16x16xf32>
    %cst_32 = arith.constant 0.353553385 : f32
    %58 = vector.broadcast %cst_32 : f32 to vector<16x16xf32>
    %59 = arith.mulf %57, %58 : vector<16x16xf32>
    %60 = arith.addf %59, %41 : vector<16x16xf32>
    %cst_33 = arith.constant dense<0xFF800000> : vector<16xf32>
    %61 = vector.multi_reduction <maximumf>, %60, %cst_33 [1] : vector<16x16xf32> to vector<16xf32>
    %62 = vector.shape_cast %61 : vector<16xf32> to vector<16x1xf32>
    %63 = vector.broadcast %62 : vector<16x1xf32> to vector<16x16xf32>
    %64 = arith.subf %60, %63 : vector<16x16xf32>
    %65 = math.exp %64 : vector<16x16xf32>
    %cst_34 = arith.constant dense<0.000000e+00> : vector<16xf32>
    %66 = vector.multi_reduction <add>, %65, %cst_34 [1] : vector<16x16xf32> to vector<16xf32>
    %67 = vector.shape_cast %66 : vector<16xf32> to vector<16x1xf32>
    %68 = tpu.reciprocal %67 {approx = true} : vector<16x1xf32> -> vector<16x1xf32>
    %69 = vector.broadcast %68 : vector<16x1xf32> to vector<16x16xf32>
    %70 = arith.mulf %65, %69 : vector<16x16xf32>
    %71 = arith.truncf %70 : vector<16x16xf32> to vector<16x16xbf16>
    %72 = vector.broadcast %54 : vector<1x32xbf16> to vector<16x32xbf16>
    %73 = arith.mulf %44, %72 : vector<16x32xbf16>
    %cst_35 = arith.constant dense<0.000000e+00> : vector<16x32xf32>
    %74 = tpu.matmul %71, %73, %cst_35 {dimension_numbers = #tpu.dot_dimension_numbers<[1], [0], [0], [1], [0, 0, 1, 1], [], []>} : vector<16x16xbf16>, vector<16x32xbf16>, vector<16x32xf32> -> vector<16x32xf32>
    %75 = arith.addf %46, %74 : vector<16x32xf32>
    %c8_i32_36 = arith.constant 8 : i32
    %76 = vector.broadcast %c8_i32_36 : i32 to vector<1x32xi32>
    %77 = arith.cmpi sge, %45, %76 : vector<1x32xi32>
    %c16_i32 = arith.constant 16 : i32
    %78 = vector.broadcast %c16_i32 : i32 to vector<1x32xi32>
    %79 = arith.cmpi slt, %45, %78 : vector<1x32xi32>
    %80 = arith.andi %77, %79 : vector<1x32xi1>
    %81 = arith.extui %80 : vector<1x32xi1> to vector<1x32xi32>
    %82 = arith.sitofp %81 : vector<1x32xi32> to vector<1x32xf32>
    %83 = arith.truncf %82 : vector<1x32xf32> to vector<1x32xbf16>
    %84 = vector.broadcast %83 : vector<1x32xbf16> to vector<16x32xbf16>
    %85 = arith.mulf %43, %84 : vector<16x32xbf16>
    %cst_37 = arith.constant dense<0.000000e+00> : vector<16x16xf32>
    %86 = tpu.matmul %42, %85, %cst_37 {dimension_numbers = #tpu.dot_dimension_numbers<[1], [1], [0], [0], [0, 0, 1, 0], [], []>} : vector<16x32xbf16>, vector<16x32xbf16>, vector<16x16xf32> -> vector<16x16xf32>
    %cst_38 = arith.constant 0.353553385 : f32
    %87 = vector.broadcast %cst_38 : f32 to vector<16x16xf32>
    %88 = arith.mulf %86, %87 : vector<16x16xf32>
    %89 = arith.addf %88, %41 : vector<16x16xf32>
    %cst_39 = arith.constant dense<0xFF800000> : vector<16xf32>
    %90 = vector.multi_reduction <maximumf>, %89, %cst_39 [1] : vector<16x16xf32> to vector<16xf32>
    %91 = vector.shape_cast %90 : vector<16xf32> to vector<16x1xf32>
    %92 = vector.broadcast %91 : vector<16x1xf32> to vector<16x16xf32>
    %93 = arith.subf %89, %92 : vector<16x16xf32>
    %94 = math.exp %93 : vector<16x16xf32>
    %cst_40 = arith.constant dense<0.000000e+00> : vector<16xf32>
    %95 = vector.multi_reduction <add>, %94, %cst_40 [1] : vector<16x16xf32> to vector<16xf32>
    %96 = vector.shape_cast %95 : vector<16xf32> to vector<16x1xf32>
    %97 = tpu.reciprocal %96 {approx = true} : vector<16x1xf32> -> vector<16x1xf32>
    %98 = vector.broadcast %97 : vector<16x1xf32> to vector<16x16xf32>
    %99 = arith.mulf %94, %98 : vector<16x16xf32>
    %100 = arith.truncf %99 : vector<16x16xf32> to vector<16x16xbf16>
    %101 = vector.broadcast %83 : vector<1x32xbf16> to vector<16x32xbf16>
    %102 = arith.mulf %44, %101 : vector<16x32xbf16>
    %cst_41 = arith.constant dense<0.000000e+00> : vector<16x32xf32>
    %103 = tpu.matmul %100, %102, %cst_41 {dimension_numbers = #tpu.dot_dimension_numbers<[1], [0], [0], [1], [0, 0, 1, 1], [], []>} : vector<16x16xbf16>, vector<16x32xbf16>, vector<16x32xf32> -> vector<16x32xf32>
    %104 = arith.addf %75, %103 : vector<16x32xf32>
    %c16_i32_42 = arith.constant 16 : i32
    %105 = vector.broadcast %c16_i32_42 : i32 to vector<1x32xi32>
    %106 = arith.cmpi sge, %45, %105 : vector<1x32xi32>
    %c24_i32 = arith.constant 24 : i32
    %107 = vector.broadcast %c24_i32 : i32 to vector<1x32xi32>
    %108 = arith.cmpi slt, %45, %107 : vector<1x32xi32>
    %109 = arith.andi %106, %108 : vector<1x32xi1>
    %110 = arith.extui %109 : vector<1x32xi1> to vector<1x32xi32>
    %111 = arith.sitofp %110 : vector<1x32xi32> to vector<1x32xf32>
    %112 = arith.truncf %111 : vector<1x32xf32> to vector<1x32xbf16>
    %113 = vector.broadcast %112 : vector<1x32xbf16> to vector<16x32xbf16>
    %114 = arith.mulf %43, %113 : vector<16x32xbf16>
    %cst_43 = arith.constant dense<0.000000e+00> : vector<16x16xf32>
    %115 = tpu.matmul %42, %114, %cst_43 {dimension_numbers = #tpu.dot_dimension_numbers<[1], [1], [0], [0], [0, 0, 1, 0], [], []>} : vector<16x32xbf16>, vector<16x32xbf16>, vector<16x16xf32> -> vector<16x16xf32>
    %cst_44 = arith.constant 0.353553385 : f32
    %116 = vector.broadcast %cst_44 : f32 to vector<16x16xf32>
    %117 = arith.mulf %115, %116 : vector<16x16xf32>
    %118 = arith.addf %117, %41 : vector<16x16xf32>
    %cst_45 = arith.constant dense<0xFF800000> : vector<16xf32>
    %119 = vector.multi_reduction <maximumf>, %118, %cst_45 [1] : vector<16x16xf32> to vector<16xf32>
    %120 = vector.shape_cast %119 : vector<16xf32> to vector<16x1xf32>
    %121 = vector.broadcast %120 : vector<16x1xf32> to vector<16x16xf32>
    %122 = arith.subf %118, %121 : vector<16x16xf32>
    %123 = math.exp %122 : vector<16x16xf32>
    %cst_46 = arith.constant dense<0.000000e+00> : vector<16xf32>
    %124 = vector.multi_reduction <add>, %123, %cst_46 [1] : vector<16x16xf32> to vector<16xf32>
    %125 = vector.shape_cast %124 : vector<16xf32> to vector<16x1xf32>
    %126 = tpu.reciprocal %125 {approx = true} : vector<16x1xf32> -> vector<16x1xf32>
    %127 = vector.broadcast %126 : vector<16x1xf32> to vector<16x16xf32>
    %128 = arith.mulf %123, %127 : vector<16x16xf32>
    %129 = arith.truncf %128 : vector<16x16xf32> to vector<16x16xbf16>
    %130 = vector.broadcast %112 : vector<1x32xbf16> to vector<16x32xbf16>
    %131 = arith.mulf %44, %130 : vector<16x32xbf16>
    %cst_47 = arith.constant dense<0.000000e+00> : vector<16x32xf32>
    %132 = tpu.matmul %129, %131, %cst_47 {dimension_numbers = #tpu.dot_dimension_numbers<[1], [0], [0], [1], [0, 0, 1, 1], [], []>} : vector<16x16xbf16>, vector<16x32xbf16>, vector<16x32xf32> -> vector<16x32xf32>
    %133 = arith.addf %104, %132 : vector<16x32xf32>
    %c24_i32_48 = arith.constant 24 : i32
    %134 = vector.broadcast %c24_i32_48 : i32 to vector<1x32xi32>
    %135 = arith.cmpi sge, %45, %134 : vector<1x32xi32>
    %c32_i32 = arith.constant 32 : i32
    %136 = vector.broadcast %c32_i32 : i32 to vector<1x32xi32>
    %137 = arith.cmpi slt, %45, %136 : vector<1x32xi32>
    %138 = arith.andi %135, %137 : vector<1x32xi1>
    %139 = arith.extui %138 : vector<1x32xi1> to vector<1x32xi32>
    %140 = arith.sitofp %139 : vector<1x32xi32> to vector<1x32xf32>
    %141 = arith.truncf %140 : vector<1x32xf32> to vector<1x32xbf16>
    %142 = vector.broadcast %141 : vector<1x32xbf16> to vector<16x32xbf16>
    %143 = arith.mulf %43, %142 : vector<16x32xbf16>
    %cst_49 = arith.constant dense<0.000000e+00> : vector<16x16xf32>
    %144 = tpu.matmul %42, %143, %cst_49 {dimension_numbers = #tpu.dot_dimension_numbers<[1], [1], [0], [0], [0, 0, 1, 0], [], []>} : vector<16x32xbf16>, vector<16x32xbf16>, vector<16x16xf32> -> vector<16x16xf32>
    %cst_50 = arith.constant 0.353553385 : f32
    %145 = vector.broadcast %cst_50 : f32 to vector<16x16xf32>
    %146 = arith.mulf %144, %145 : vector<16x16xf32>
    %147 = arith.addf %146, %41 : vector<16x16xf32>
    %cst_51 = arith.constant dense<0xFF800000> : vector<16xf32>
    %148 = vector.multi_reduction <maximumf>, %147, %cst_51 [1] : vector<16x16xf32> to vector<16xf32>
    %149 = vector.shape_cast %148 : vector<16xf32> to vector<16x1xf32>
    %150 = vector.broadcast %149 : vector<16x1xf32> to vector<16x16xf32>
    %151 = arith.subf %147, %150 : vector<16x16xf32>
    %152 = math.exp %151 : vector<16x16xf32>
    %cst_52 = arith.constant dense<0.000000e+00> : vector<16xf32>
    %153 = vector.multi_reduction <add>, %152, %cst_52 [1] : vector<16x16xf32> to vector<16xf32>
    %154 = vector.shape_cast %153 : vector<16xf32> to vector<16x1xf32>
    %155 = tpu.reciprocal %154 {approx = true} : vector<16x1xf32> -> vector<16x1xf32>
    %156 = vector.broadcast %155 : vector<16x1xf32> to vector<16x16xf32>
    %157 = arith.mulf %152, %156 : vector<16x16xf32>
    %158 = arith.truncf %157 : vector<16x16xf32> to vector<16x16xbf16>
    %159 = vector.broadcast %141 : vector<1x32xbf16> to vector<16x32xbf16>
    %160 = arith.mulf %44, %159 : vector<16x32xbf16>
    %cst_53 = arith.constant dense<0.000000e+00> : vector<16x32xf32>
    %161 = tpu.matmul %158, %160, %cst_53 {dimension_numbers = #tpu.dot_dimension_numbers<[1], [0], [0], [1], [0, 0, 1, 1], [], []>} : vector<16x16xbf16>, vector<16x32xbf16>, vector<16x32xf32> -> vector<16x32xf32>
    %162 = arith.addf %133, %161 : vector<16x32xf32>
    %163 = arith.truncf %162 : vector<16x32xf32> to vector<16x32xbf16>
    %c0_54 = arith.constant 0 : index
    %c0_55 = arith.constant 0 : index
    %164 = vector.load %arg11[%c0_54, %c0_55] : memref<32x32xbf16, #tpu.memory_space<vmem>>, vector<32x32xbf16>
    %cst_56 = arith.constant dense<0.000000e+00> : vector<16x32xf32>
    %165 = tpu.matmul %163, %164, %cst_56 {dimension_numbers = #tpu.dot_dimension_numbers<[1], [0], [0], [1], [0, 0, 1, 1], [], []>} : vector<16x32xbf16>, vector<32x32xbf16>, vector<16x32xf32> -> vector<16x32xf32>
    %c0_57 = arith.constant 0 : index
    %c0_58 = arith.constant 0 : index
    %166 = vector.load %arg12[%c0_57, %c0_58] : memref<1x32xf32, #tpu.memory_space<vmem>>, vector<1x32xf32>
    %167 = vector.broadcast %166 : vector<1x32xf32> to vector<16x32xf32>
    %168 = arith.addf %165, %167 : vector<16x32xf32>
    %169 = arith.addf %0, %168 : vector<16x32xf32>
    %c0_59 = arith.constant 0 : index
    %c0_60 = arith.constant 0 : index
    %170 = vector.load %arg13[%c0_59, %c0_60] : memref<1x32xf32, #tpu.memory_space<vmem>>, vector<1x32xf32>
    %c0_61 = arith.constant 0 : index
    %c0_62 = arith.constant 0 : index
    %171 = vector.load %arg14[%c0_61, %c0_62] : memref<1x32xf32, #tpu.memory_space<vmem>>, vector<1x32xf32>
    %cst_63 = arith.constant dense<0.000000e+00> : vector<16xf32>
    %172 = vector.multi_reduction <add>, %169, %cst_63 [1] : vector<16x32xf32> to vector<16xf32>
    %173 = vector.shape_cast %172 : vector<16xf32> to vector<16x1xf32>
    %cst_64 = arith.constant 3.200000e+01 : f32
    %174 = vector.broadcast %cst_64 : f32 to vector<16x1xf32>
    %175 = arith.divf %173, %174 : vector<16x1xf32>
    %176 = vector.broadcast %175 : vector<16x1xf32> to vector<16x32xf32>
    %177 = arith.subf %169, %176 : vector<16x32xf32>
    %178 = arith.mulf %177, %177 : vector<16x32xf32>
    %cst_65 = arith.constant dense<0.000000e+00> : vector<16xf32>
    %179 = vector.multi_reduction <add>, %178, %cst_65 [1] : vector<16x32xf32> to vector<16xf32>
    %180 = vector.shape_cast %179 : vector<16xf32> to vector<16x1xf32>
    %cst_66 = arith.constant 3.200000e+01 : f32
    %181 = vector.broadcast %cst_66 : f32 to vector<16x1xf32>
    %182 = arith.divf %180, %181 : vector<16x1xf32>
    %cst_67 = arith.constant 9.99999974E-6 : f32
    %183 = vector.broadcast %cst_67 : f32 to vector<16x1xf32>
    %184 = arith.addf %182, %183 : vector<16x1xf32>
    %185 = math.rsqrt %184 : vector<16x1xf32>
    %186 = vector.broadcast %185 : vector<16x1xf32> to vector<16x32xf32>
    %187 = arith.mulf %177, %186 : vector<16x32xf32>
    %188 = vector.broadcast %170 : vector<1x32xf32> to vector<16x32xf32>
    %189 = arith.mulf %187, %188 : vector<16x32xf32>
    %190 = vector.broadcast %171 : vector<1x32xf32> to vector<16x32xf32>
    %191 = arith.addf %189, %190 : vector<16x32xf32>
    %192 = arith.truncf %191 : vector<16x32xf32> to vector<16x32xbf16>
    %c0_68 = arith.constant 0 : index
    %c0_69 = arith.constant 0 : index
    %193 = vector.load %arg15[%c0_68, %c0_69] : memref<32x128xbf16, #tpu.memory_space<vmem>>, vector<32x128xbf16>
    %cst_70 = arith.constant dense<0.000000e+00> : vector<16x128xf32>
    %194 = tpu.matmul %192, %193, %cst_70 {dimension_numbers = #tpu.dot_dimension_numbers<[1], [0], [0], [1], [0, 0, 1, 1], [], []>} : vector<16x32xbf16>, vector<32x128xbf16>, vector<16x128xf32> -> vector<16x128xf32>
    %c0_71 = arith.constant 0 : index
    %c0_72 = arith.constant 0 : index
    %195 = vector.load %arg16[%c0_71, %c0_72] : memref<1x128xf32, #tpu.memory_space<vmem>>, vector<1x128xf32>
    %196 = vector.broadcast %195 : vector<1x128xf32> to vector<16x128xf32>
    %197 = arith.addf %194, %196 : vector<16x128xf32>
    %cst_73 = arith.constant 5.000000e-01 : f32
    %198 = vector.broadcast %cst_73 : f32 to vector<16x128xf32>
    %199 = arith.mulf %198, %197 : vector<16x128xf32>
    %cst_74 = arith.constant 4.471500e-02 : f32
    %200 = vector.broadcast %cst_74 : f32 to vector<16x128xf32>
    %201 = arith.mulf %200, %197 : vector<16x128xf32>
    %202 = arith.mulf %201, %197 : vector<16x128xf32>
    %203 = arith.mulf %202, %197 : vector<16x128xf32>
    %204 = arith.addf %197, %203 : vector<16x128xf32>
    %cst_75 = arith.constant 0.797884583 : f32
    %205 = vector.broadcast %cst_75 : f32 to vector<16x128xf32>
    %206 = arith.mulf %205, %204 : vector<16x128xf32>
    %207 = math.tanh %206 : vector<16x128xf32>
    %cst_76 = arith.constant 1.000000e+00 : f32
    %208 = vector.broadcast %cst_76 : f32 to vector<16x128xf32>
    %209 = arith.addf %208, %207 : vector<16x128xf32>
    %210 = arith.mulf %199, %209 : vector<16x128xf32>
    %211 = arith.truncf %210 : vector<16x128xf32> to vector<16x128xbf16>
    %c0_77 = arith.constant 0 : index
    %c0_78 = arith.constant 0 : index
    %212 = vector.load %arg17[%c0_77, %c0_78] : memref<128x32xbf16, #tpu.memory_space<vmem>>, vector<128x32xbf16>
    %cst_79 = arith.constant dense<0.000000e+00> : vector<16x32xf32>
    %213 = tpu.matmul %211, %212, %cst_79 {dimension_numbers = #tpu.dot_dimension_numbers<[1], [0], [0], [1], [0, 0, 1, 1], [], []>} : vector<16x128xbf16>, vector<128x32xbf16>, vector<16x32xf32> -> vector<16x32xf32>
    %c0_80 = arith.constant 0 : index
    %c0_81 = arith.constant 0 : index
    %214 = vector.load %arg18[%c0_80, %c0_81] : memref<1x32xf32, #tpu.memory_space<vmem>>, vector<1x32xf32>
    %215 = vector.broadcast %214 : vector<1x32xf32> to vector<16x32xf32>
    %216 = arith.addf %213, %215 : vector<16x32xf32>
    %217 = arith.addf %169, %216 : vector<16x32xf32>
    %c0_82 = arith.constant 0 : index
    %c0_83 = arith.constant 0 : index
    %218 = vector.load %arg19[%c0_82, %c0_83] : memref<16x32xf32, #tpu.memory_space<vmem>>, vector<16x32xf32>
    tpu.vector_store %arg19[%c0_82, %c0_83], %217 {strides = array<i32>} : memref<16x32xf32, #tpu.memory_space<vmem>>, vector<16x32xf32>,
    return
  }
  func.func @transform_0(%arg0: i32) -> (i32, i32) {
    %c0_i32 = arith.constant 0 : i32
    %c0_i32_0 = arith.constant 0 : i32
    %c0_i32_1 = arith.constant 0 : i32
    return %c0_i32, %c0_i32_0 : i32, i32
  }
  func.func @transform_1(%arg0: i32) -> (i32, i32) {
    %c0_i32 = arith.constant 0 : i32
    %c0_i32_0 = arith.constant 0 : i32
    %c0_i32_1 = arith.constant 0 : i32
    return %c0_i32, %c0_i32_0 : i32, i32
  }
  func.func @transform_2(%arg0: i32) -> (i32, i32) {
    %c0_i32 = arith.constant 0 : i32
    %c0_i32_0 = arith.constant 0 : i32
    %c0_i32_1 = arith.constant 0 : i32
    return %c0_i32, %c0_i32_0 : i32, i32
  }
  func.func @transform_3(%arg0: i32) -> (i32, i32) {
    %c0_i32 = arith.constant 0 : i32
    %c0_i32_0 = arith.constant 0 : i32
    %c0_i32_1 = arith.constant 0 : i32
    return %c0_i32, %c0_i32_0 : i32, i32
  }
  func.func @transform_4(%arg0: i32) -> (i32, i32) {
    %c0_i32 = arith.constant 0 : i32
    %c0_i32_0 = arith.constant 0 : i32
    %c0_i32_1 = arith.constant 0 : i32
    return %c0_i32, %c0_i32_0 : i32, i32
  }
  func.func @transform_5(%arg0: i32) -> (i32, i32) {
    %c0_i32 = arith.constant 0 : i32
    %c0_i32_0 = arith.constant 0 : i32
    %c0_i32_1 = arith.constant 0 : i32
    return %c0_i32, %c0_i32_0 : i32, i32
  }
  func.func @transform_6(%arg0: i32) -> (i32, i32) {
    %c0_i32 = arith.constant 0 : i32
    %c0_i32_0 = arith.constant 0 : i32
    %c0_i32_1 = arith.constant 0 : i32
    return %c0_i32, %c0_i32_0 : i32, i32
  }
  func.func @transform_7(%arg0: i32) -> (i32, i32) {
    %c0_i32 = arith.constant 0 : i32
    %c0_i32_0 = arith.constant 0 : i32
    %c0_i32_1 = arith.constant 0 : i32
    return %c0_i32, %c0_i32_0 : i32, i32
  }
  func.func @transform_8(%arg0: i32) -> (i32, i32) {
    %c0_i32 = arith.constant 0 : i32
    %c0_i32_0 = arith.constant 0 : i32
    %c0_i32_1 = arith.constant 0 : i32
    return %c0_i32, %c0_i32_0 : i32, i32
  }
  func.func @transform_9(%arg0: i32) -> (i32, i32) {
    %c0_i32 = arith.constant 0 : i32
    %c0_i32_0 = arith.constant 0 : i32
    %c0_i32_1 = arith.constant 0 : i32
    return %c0_i32, %c0_i32_0 : i32, i32
  }
  func.func @transform_10(%arg0: i32) -> (i32, i32) {
    %c0_i32 = arith.constant 0 : i32
    %c0_i32_0 = arith.constant 0 : i32
    %c0_i32_1 = arith.constant 0 : i32
    return %c0_i32, %c0_i32_0 : i32, i32
  }
  func.func @transform_11(%arg0: i32) -> (i32, i32) {
    %c0_i32 = arith.constant 0 : i32
    %c0_i32_0 = arith.constant 0 : i32
    %c0_i32_1 = arith.constant 0 : i32
    return %c0_i32, %c0_i32_0 : i32, i32
  }
  func.func @transform_12(%arg0: i32) -> (i32, i32) {
    %c0_i32 = arith.constant 0 : i32
    %c0_i32_0 = arith.constant 0 : i32
    %c0_i32_1 = arith.constant 0 : i32
    return %c0_i32, %c0_i32_0 : i32, i32
  }
  func.func @transform_13(%arg0: i32) -> (i32, i32) {
    %c0_i32 = arith.constant 0 : i32
    %c0_i32_0 = arith.constant 0 : i32
    %c0_i32_1 = arith.constant 0 : i32
    return %c0_i32, %c0_i32_0 : i32, i32
  }
  func.func @transform_14(%arg0: i32) -> (i32, i32) {
    %c0_i32 = arith.constant 0 : i32
    %c0_i32_0 = arith.constant 0 : i32
    %c0_i32_1 = arith.constant 0 : i32
    return %c0_i32, %c0_i32_0 : i32, i32
  }
  func.func @transform_15(%arg0: i32) -> (i32, i32) {
    %c0_i32 = arith.constant 0 : i32
    %c0_i32_0 = arith.constant 0 : i32
    %c0_i32_1 = arith.constant 0 : i32
    return %c0_i32, %c0_i32_0 : i32, i32
  }
  func.func @transform_16(%arg0: i32) -> (i32, i32) {
    %c0_i32 = arith.constant 0 : i32
    %c0_i32_0 = arith.constant 0 : i32
    %c0_i32_1 = arith.constant 0 : i32
    return %c0_i32, %c0_i32_0 : i32, i32
  }
  func.func @transform_17(%arg0: i32) -> (i32, i32) {
    %c0_i32 = arith.constant 0 : i32
    %c0_i32_0 = arith.constant 0 : i32
    %c0_i32_1 = arith.constant 0 : i32
    return %c0_i32, %c0_i32_0 : i32, i32
  }
  func.func @transform_18(%arg0: i32) -> (i32, i32) {
    %c0_i32 = arith.constant 0 : i32
    %c0_i32_0 = arith.constant 0 : i32
    %c0_i32_1 = arith.constant 0 : i32
    return %c0_i32, %c0_i32_0 : i32, i32
  }
  func.func @transform_19(%arg0: i32) -> (i32, i32) {
    %c0_i32 = arith.constant 0 : i32
    %c0_i32_0 = arith.constant 0 : i32
    %c0_i32_1 = arith.constant 0 : i32
    return %c0_i32, %c0_i32_0 : i32, i32
  }
  func.func @transform_20(%arg0: i32) -> (i32, i32) {
    %c0_i32 = arith.constant 0 : i32
    %c0_i32_0 = arith.constant 0 : i32
    %c0_i32_1 = arith.constant 0 : i32
    return %c0_i32, %c0_i32_0 : i32, i32
  }
}

</mosaic_0001>

<llo_original>
// kernel: _lambda_.5
$region0: #{_lambda_.5}
  #allocation0 [shape = 'u32[]', space=smem, size = 0x4, offset = 0x4, fixed_abs, tag = 'smem constant byte address 0x4 - core index']
  #allocation1 [shape = 'u32[144,128]{1,0:T(1,128)}', space=vmem, size = 0x12000, scoped, tag = 'internal scratch']
  %s0 = inlined_call_operand.vmem [shape: f32[2,32], index: 0, kind: input, shape index: {}]
  %s1 = inlined_call_operand.vmem [shape: f32[1,32], index: 1, kind: input, shape index: {}]
  %s2 = inlined_call_operand.vmem [shape: f32[1,32], index: 2, kind: input, shape index: {}]
  %s3 = inlined_call_operand.vmem [shape: bf16[32,64], index: 3, kind: input, shape index: {}]
  %s4 = inlined_call_operand.hbm [shape: f32[2,64], index: 4, kind: output, shape index: {}]
  %s5 = sld [smem:[#allocation0]]
  $region26: #{_lambda_.5} parent=0
    _
  %s7 = ssub.s32 1, %s5
  %s8 = scalar_select 0, %s7, %s5
  $region1: #{_lambda_.5} parent=0
    #allocation2 [shape = 'u8[1024]{0}', space=vmem, size = 0x400, scoped, tag = 'output window, operand 0, single buffered']
    #allocation3 [shape = 's32[1]{0}', space=sflag, size = 0x4, scoped, tag = 'scoped memory for _lambda_.5']
    %9 = vsyncpa [#allocation3], 0
    // Predicated region
    $region2: #{_lambda_.5} parent=1 // pred_check
      _
    $region3: #{_lambda_.5} parent=1 // pred_check_branch
      %11 = sbr.rel (0) target = $region5
    $region4: #{_lambda_.5} parent=1 // pred_region
      _
    $region5: #{_lambda_.5} parent=1 // pred_fallthru
      _
    // Predicated region
    $region6: #{_lambda_.5} parent=1 // pred_check
      _
    $region7: #{_lambda_.5} parent=1 // pred_check_branch
      %13 = sbr.rel (0) target = $region9
    $region8: #{_lambda_.5} parent=1 // pred_region
      _
    $region9: #{_lambda_.5} parent=1 // pred_fallthru
      _
    // Predicated region
    $region10: #{_lambda_.5} parent=1 // pred_check
      _
    $region11: #{_lambda_.5} parent=1 // pred_check_branch
      %15 = sbr.rel (0) target = $region13
    $region12: #{_lambda_.5} parent=1 // pred_region
      _
    $region13: #{_lambda_.5} parent=1 // pred_fallthru
      _
    // Predicated region
    $region14: #{_lambda_.5} parent=1 // pred_check
      _
    $region15: #{_lambda_.5} parent=1 // pred_check_branch
      %17 = sbr.rel (0) target = $region17
    $region16: #{_lambda_.5} parent=1 // pred_region
      _
    $region17: #{_lambda_.5} parent=1 // pred_fallthru
      _
    %v19 = vld [vmem:[%s0] sm:$0x3]
    %v20 = vld [vmem:[%s1] sm:$0x1]
    %v21 = vld [vmem:[%s2] sm:$0x1]
    %vm22 = vcmask 254976
    %v23 = vsel %vm22, %v19, 0.0
    %24 = vadd.xlane.f32.xlu0 %v23
    %v25 = vpop.xlane.xlu0 %24
    %v26 = vrcp.pop 32.0
    %v27 = vmul.f32 %v25, %v26
    %v28 = vsub.f32 %v19, %v27
    %v29 = vmul.f32 %v28, %v28
    %v30 = vsel %vm22, %v29, 0.0
    %31 = vadd.xlane.f32.xlu0 %v30
    %v32 = vpop.xlane.xlu0 %31
    %v33 = vmul.f32 %v32, %v26
    %v34 = vadd.f32 %v33, 1e-05
    %v35 = vrsqrt.pop %v34
    %v36 = vmul.f32 %v28, %v35
    %v38 = vlaneseq
    %v39 = vshrl.u32 %v38, 7
    %v40 = vsub.s32 0, %v39
    %v41 = vrot.slane %v20, %v40
    %v43 = vmul.f32 %v36, %v41
    %v45 = vlaneseq
    %v46 = vshrl.u32 %v45, 7
    %v47 = vsub.s32 0, %v46
    %v48 = vrot.slane %v21, %v47
    %v50 = vadd.f32 %v43, %v48
    %v51 = vpack.c.bf16 %v50, %v50
    %v52 = vld [vmem:[%s3] sm:$0xf]
    %v53 = vld [vmem:[%s3 + $0x4] sm:$0xf]
    %v54 = vld [vmem:[%s3 + $0x8] sm:$0xf]
    %v55 = vld [vmem:[%s3 + $0xc] sm:$0xf]
    %v60 = vunpack.c.l.b16 %v52
    %v61 = vunpack.c.l.b16 %v53
    %v62 = vunpack.c.l.b16 %v54
    %v63 = vunpack.c.l.b16 %v55
    %v64 = vpack.c.b16 %v61, %v60
    %v65 = vpack.c.b16 %v63, %v62
    %vm68 = vcmask 261120
    %v70 = vsel %vm68, %v51, 0
    %72 = vmatprep.subr.bf16.mxu0 0
    %73 = vmatpush1.bf16.msra.mxu0 %v64
    %74 = vmatprep.subr.bf16.mxu0 0
    %75 = vmatpush1.bf16.msra.mxu0 %v65
    %76 = vmatprep.subr.bf16.mxu0 0
    %77 = vmatpush1.bf16.msra.mxu0 0
    %78 = vmatprep.subr.bf16.mxu0 0
    %79 = vmatpush1.bf16.msra.mxu0 0
    %80 = vmatprep.subr.bf16.mxu0 0
    %81 = vmatpush1.bf16.msra.mxu0 0
    %82 = vmatprep.subr.bf16.mxu0 0
    %83 = vmatpush1.bf16.msra.mxu0 0
    %84 = vmatprep.subr.bf16.mxu0 0
    %85 = vmatpush1.bf16.msra.mxu0 0
    %86 = vmatprep.subr.bf16.mxu0 0
    %87 = vmatpush1.bf16.msra.mxu0 0
    %88 = vmatprep.subr.bf16.mxu0 0
    %89 = vmatpush1.bf16.msra.mxu0 0
    %90 = vmatprep.subr.bf16.mxu0 0
    %91 = vmatpush1.bf16.msra.mxu0 0
    %92 = vmatprep.subr.bf16.mxu0 0
    %93 = vmatpush1.bf16.msra.mxu0 0
    %94 = vmatprep.subr.bf16.mxu0 0
    %95 = vmatpush1.bf16.msra.mxu0 0
    %96 = vmatprep.subr.bf16.mxu0 0
    %97 = vmatpush1.bf16.msra.mxu0 0
    %98 = vmatprep.subr.bf16.mxu0 0
    %99 = vmatpush1.bf16.msra.mxu0 0
    %100 = vmatprep.subr.bf16.mxu0 0
    %101 = vmatpush1.bf16.msra.mxu0 0
    %102 = vmatprep.subr.bf16.mxu0 0
    %103 = vmatpush1.bf16.msra.mxu0 0
    %104 = vmatprep.mubr.bf16.mxu0 0
    %105 = vmatmul.mubr.bf16.gmra.mrb[0].mxu0 %v70
    %v106 = vpop.f32.mrb[0].mxu0
    %v107 = vadd.f32 0.0, %v106
    %v108 = vpop.f32.mrb[0].mxu0
    %v109 = vpop.f32.mrb[0].mxu0
    %v110 = vpop.f32.mrb[0].mxu0
    %111 = vdwg.mxu0
    %vm112 = vcmask 517120
    %113 = vst.msk [vmem:[#allocation2] sm:$0x3] %vm112, %v107
    // Predicated region
    $region18: #{_lambda_.5} parent=1 // pred_check
      _
    $region19: #{_lambda_.5} parent=1 // pred_check_branch
      %115 = sbr.rel (0) target = $region21
    $region20: #{_lambda_.5} parent=1 // pred_region
      %s117 = ssub.s32 32, 32
      %118 = vsyncadd [#allocation3], %s117
      %s120 = sshll.u32 [#allocation2], 4
      %s121 = int_to_ptr.vmem [resolvable:$true] %s120
      %123 = dma.vmem_to_hbm [thread:$0]  %s121, 32, %s4, [#allocation3]
    $region21: #{_lambda_.5} parent=1 // pred_fallthru
      _
    // Predicated region
    $region22: #{_lambda_.5} parent=1 // pred_check
      _
    $region23: #{_lambda_.5} parent=1 // pred_check_branch
      %125 = sbr.rel (0) target = $region25
    $region24: #{_lambda_.5} parent=1 // pred_region
      %126 = dma.done [#allocation3], 32
    $region25: #{_lambda_.5} parent=1 // pred_fallthru
      _
    %127 = vsyncpa [#allocation3], 1

// kernel: _lambda_.3
$region0: #{_lambda_.3}
  #allocation0 [shape = 'u32[]', space=smem, size = 0x4, offset = 0x4, fixed_abs, tag = 'smem constant byte address 0x4 - core index']
  #allocation1 [shape = 'u32[144,128]{1,0:T(1,128)}', space=vmem, size = 0x12000, scoped, tag = 'internal scratch']
  %s0 = inlined_call_operand.vmem [shape: f32[16,32], index: 0, kind: input, shape index: {}]
  %s1 = inlined_call_operand.vmem [shape: f32[16,16], index: 1, kind: input, shape index: {}]
  %s2 = inlined_call_operand.vmem [shape: f32[1,32], index: 2, kind: input, shape index: {}]
  %s3 = inlined_call_operand.vmem [shape: f32[1,32], index: 3, kind: input, shape index: {}]
  %s4 = inlined_call_operand.vmem [shape: bf16[32,32], index: 4, kind: input, shape index: {}]
  %s5 = inlined_call_operand.vmem [shape: bf16[32,32], index: 5, kind: input, shape index: {}]
  %s6 = inlined_call_operand.vmem [shape: bf16[32,32], index: 6, kind: input, shape index: {}]
  %s7 = inlined_call_operand.vmem [shape: f32[1,32], index: 7, kind: input, shape index: {}]
  %s8 = inlined_call_operand.vmem [shape: f32[1,32], index: 8, kind: input, shape index: {}]
  %s9 = inlined_call_operand.vmem [shape: f32[1,32], index: 9, kind: input, shape index: {}]
  %s10 = inlined_call_operand.vmem [shape: bf16[32,32], index: 10, kind: input, shape index: {}]
  %s11 = inlined_call_operand.vmem [shape: f32[1,32], index: 11, kind: input, shape index: {}]
  %s12 = inlined_call_operand.vmem [shape: f32[1,32], index: 12, kind: input, shape index: {}]
  %s13 = inlined_call_operand.vmem [shape: f32[1,32], index: 13, kind: input, shape index: {}]
  %s14 = inlined_call_operand.vmem [shape: bf16[32,128], index: 14, kind: input, shape index: {}]
  %s15 = inlined_call_operand.vmem [shape: f32[1,128], index: 15, kind: input, shape index: {}]
  %s16 = inlined_call_operand.vmem [shape: bf16[128,32], index: 16, kind: input, shape index: {}]
  %s17 = inlined_call_operand.vmem [shape: f32[1,32], index: 17, kind: input, shape index: {}]
  %s18 = inlined_call_operand.vmem [shape: f32[16,32], index: 18, kind: output, shape index: {0}]
  %s19 = inlined_call_operand.vmem [shape: f32[16,32], index: 19, kind: output, shape index: {1}]
  %s20 = inlined_call_operand.vmem [shape: f32[16,32], index: 20, kind: output, shape index: {2}]
  %21 = xla_tuple %s18, %s19, %s20
  %s22 = sld [smem:[#allocation0]]
  $region98: #{_lambda_.3} parent=0
    _
  %s24 = ssub.s32 1, %s22
  %s25 = scalar_select 0, %s24, %s22
  // Predicated region
  $region2: #{_lambda_.3} parent=0 // pred_check
    _
  $region3: #{_lambda_.3} parent=0 // pred_check_branch
    %27 = sbr.rel (0) target = $region5
  $region4: #{_lambda_.3} parent=0 // pred_region
    _
  $region5: #{_lambda_.3} parent=0 // pred_fallthru
    _
  // Predicated region
  $region6: #{_lambda_.3} parent=0 // pred_check
    _
  $region7: #{_lambda_.3} parent=0 // pred_check_branch
    %29 = sbr.rel (0) target = $region9
  $region8: #{_lambda_.3} parent=0 // pred_region
    _
  $region9: #{_lambda_.3} parent=0 // pred_fallthru
    _
  // Predicated region
  $region10: #{_lambda_.3} parent=0 // pred_check
    _
  $region11: #{_lambda_.3} parent=0 // pred_check_branch
    %31 = sbr.rel (0) target = $region13
  $region12: #{_lambda_.3} parent=0 // pred_region
    _
  $region13: #{_lambda_.3} parent=0 // pred_fallthru
    _
  // Predicated region
  $region14: #{_lambda_.3} parent=0 // pred_check
    _
  $region15: #{_lambda_.3} parent=0 // pred_check_branch
    %33 = sbr.rel (0) target = $region17
  $region16: #{_lambda_.3} parent=0 // pred_region
    _
  $region17: #{_lambda_.3} parent=0 // pred_fallthru
    _
  // Predicated region
  $region18: #{_lambda_.3} parent=0 // pred_check
    _
  $region19: #{_lambda_.3} parent=0 // pred_check_branch
    %35 = sbr.rel (0) target = $region21
  $region20: #{_lambda_.3} parent=0 // pred_region
    _
  $region21: #{_lambda_.3} parent=0 // pred_fallthru
    _
  // Predicated region
  $region22: #{_lambda_.3} parent=0 // pred_check
    _
  $region23: #{_lambda_.3} parent=0 // pred_check_branch
    %37 = sbr.rel (0) target = $region25
  $region24: #{_lambda_.3} parent=0 // pred_region
    _
  $region25: #{_lambda_.3} parent=0 // pred_fallthru
    _
  // Predicated region
  $region26: #{_lambda_.3} parent=0 // pred_check
    _
  $region27: #{_lambda_.3} parent=0 // pred_check_branch
    %39 = sbr.rel (0) target = $region29
  $region28: #{_lambda_.3} parent=0 // pred_region
    _
  $region29: #{_lambda_.3} parent=0 // pred_fallthru
    _
  // Predicated region
  $region30: #{_lambda_.3} parent=0 // pred_check
    _
  $region31: #{_lambda_.3} parent=0 // pred_check_branch
    %41 = sbr.rel (0) target = $region33
  $region32: #{_lambda_.3} parent=0 // pred_region
    _
  $region33: #{_lambda_.3} parent=0 // pred_fallthru
    _
  // Predicated region
  $region34: #{_lambda_.3} parent=0 // pred_check
    _
  $region35: #{_lambda_.3} parent=0 // pred_check_branch
    %43 = sbr.rel (0) target = $region37
  $region36: #{_lambda_.3} parent=0 // pred_region
    _
  $region37: #{_lambda_.3} parent=0 // pred_fallthru
    _
  // Predicated region
  $region38: #{_lambda_.3} parent=0 // pred_check
    _
  $region39: #{_lambda_.3} parent=0 // pred_check_branch
    %45 = sbr.rel (0) target = $region41
  $region40: #{_lambda_.3} parent=0 // pred_region
    _
  $region41: #{_lambda_.3} parent=0 // pred_fallthru
    _
  // Predicated region
  $region42: #{_lambda_.3} parent=0 // pred_check
    _
  $region43: #{_lambda_.3} parent=0 // pred_check_branch
    %47 = sbr.rel (0) target = $region45
  $region44: #{_lambda_.3} parent=0 // pred_region
    _
  $region45: #{_lambda_.3} parent=0 // pred_fallthru
    _
  // Predicated region
  $region46: #{_lambda_.3} parent=0 // pred_check
    _
  $region47: #{_lambda_.3} parent=0 // pred_check_branch
    %49 = sbr.rel (0) target = $region49
  $region48: #{_lambda_.3} parent=0 // pred_region
    _
  $region49: #{_lambda_.3} parent=0 // pred_fallthru
    _
  // Predicated region
  $region50: #{_lambda_.3} parent=0 // pred_check
    _
  $region51: #{_lambda_.3} parent=0 // pred_check_branch
    %51 = sbr.rel (0) target = $region53
  $region52: #{_lambda_.3} parent=0 // pred_region
    _
  $region53: #{_lambda_.3} parent=0 // pred_fallthru
    _
  // Predicated region
  $region54: #{_lambda_.3} parent=0 // pred_check
    _
  $region55: #{_lambda_.3} parent=0 // pred_check_branch
    %53 = sbr.rel (0) target = $region57
  $region56: #{_lambda_.3} parent=0 // pred_region
    _
  $region57: #{_lambda_.3} parent=0 // pred_fallthru
    _
  // Predicated region
  $region58: #{_lambda_.3} parent=0 // pred_check
    _
  $region59: #{_lambda_.3} parent=0 // pred_check_branch
    %55 = sbr.rel (0) target = $region61
  $region60: #{_lambda_.3} parent=0 // pred_region
    _
  $region61: #{_lambda_.3} parent=0 // pred_fallthru
    _
  // Predicated region
  $region62: #{_lambda_.3} parent=0 // pred_check
    _
  $region63: #{_lambda_.3} parent=0 // pred_check_branch
    %57 = sbr.rel (0) target = $region65
  $region64: #{_lambda_.3} parent=0 // pred_region
    _
  $region65: #{_lambda_.3} parent=0 // pred_fallthru
    _
  // Predicated region
  $region66: #{_lambda_.3} parent=0 // pred_check
    _
  $region67: #{_lambda_.3} parent=0 // pred_check_branch
    %59 = sbr.rel (0) target = $region69
  $region68: #{_lambda_.3} parent=0 // pred_region
    _
  $region69: #{_lambda_.3} parent=0 // pred_fallthru
    _
  // Predicated region
  $region70: #{_lambda_.3} parent=0 // pred_check
    _
  $region71: #{_lambda_.3} parent=0 // pred_check_branch
    %61 = sbr.rel (0) target = $region73
  $region72: #{_lambda_.3} parent=0 // pred_region
    _
  $region73: #{_lambda_.3} parent=0 // pred_fallthru
    _
  %v63 = vld [vmem:[%s0] sm:$0xff]
  %v64 = vld [vmem:[%s0 + $0x8] sm:$0xff]
  %v65 = vld [vmem:[%s2] sm:$0x1]
  %v66 = vld [vmem:[%s3] sm:$0x1]
  %vm67 = vcmask 261120
  %v68 = vsel %vm67, %v63, 0.0
  %69 = vadd.xlane.f32.xlu0 %v68
  %v70 = vpop.xlane.xlu0 %69
  %v71 = vsel %vm67, %v64, 0.0
  %72 = vadd.xlane.f32.xlu0 %v71
  %v73 = vpop.xlane.xlu0 %72
  %v74 = vrcp.pop 32.0
  %v75 = vmul.f32 %v70, %v74
  %v76 = vmul.f32 %v73, %v74
  %v77 = vsub.f32 %v63, %v75
  %v78 = vsub.f32 %v64, %v76
  %v79 = vmul.f32 %v77, %v77
  %v80 = vmul.f32 %v78, %v78
  %v81 = vsel %vm67, %v79, 0.0
  %82 = vadd.xlane.f32.xlu0 %v81
  %v83 = vpop.xlane.xlu0 %82
  %v84 = vsel %vm67, %v80, 0.0
  %85 = vadd.xlane.f32.xlu0 %v84
  %v86 = vpop.xlane.xlu0 %85
  %v87 = vmul.f32 %v83, %v74
  %v88 = vmul.f32 %v86, %v74
  %v89 = vadd.f32 %v87, 1e-05
  %v90 = vadd.f32 %v88, 1e-05
  %v91 = vrsqrt.pop %v89
  %v92 = vrsqrt.pop %v90
  %v93 = vmul.f32 %v77, %v91
  %v94 = vmul.f32 %v78, %v92
  %v96 = vlaneseq
  %v97 = vshrl.u32 %v96, 7
  %v98 = vsub.s32 0, %v97
  %v99 = vrot.slane %v65, %v98
  %v101 = vmul.f32 %v93, %v99
  %v102 = vmul.f32 %v94, %v99
  %v104 = vlaneseq
  %v105 = vshrl.u32 %v104, 7
  %v106 = vsub.s32 0, %v105
  %v107 = vrot.slane %v66, %v106
  %v109 = vadd.f32 %v101, %v107
  %v110 = vadd.f32 %v102, %v107
  %v111 = vpack.c.bf16 %v110, %v109
  %v112 = vld [vmem:[%s4] sm:$0xf]
  %v113 = vld [vmem:[%s4 + $0x4] sm:$0xf]
  %v114 = vld [vmem:[%s4 + $0x8] sm:$0xf]
  %v115 = vld [vmem:[%s4 + $0xc] sm:$0xf]
  %v116 = vld [vmem:[%s7] sm:$0x1]
  %v118 = vlaneseq
  %v119 = vshrl.u32 %v118, 7
  %v120 = vsub.s32 0, %v119
  %v121 = vrot.slane %v116, %v120
  %v127 = vunpack.c.l.b16 %v112
  %v128 = vunpack.c.l.b16 %v113
  %v129 = vunpack.c.l.b16 %v114
  %v130 = vunpack.c.l.b16 %v115
  %v131 = vpack.c.b16 %v128, %v127
  %v132 = vpack.c.b16 %v130, %v129
  %v136 = vsel %vm67, %v111, 0
  %138 = vmatprep.subr.bf16.mxu0 0
  %139 = vmatpush1.bf16.msra.mxu0 %v131
  %140 = vmatprep.subr.bf16.mxu0 0
  %141 = vmatpush1.bf16.msra.mxu0 %v132
  %142 = vmatprep.subr.bf16.mxu0 0
  %143 = vmatpush1.bf16.msra.mxu0 0
  %144 = vmatprep.subr.bf16.mxu0 0
  %145 = vmatpush1.bf16.msra.mxu0 0
  %146 = vmatprep.subr.bf16.mxu0 0
  %147 = vmatpush1.bf16.msra.mxu0 0
  %148 = vmatprep.subr.bf16.mxu0 0
  %149 = vmatpush1.bf16.msra.mxu0 0
  %150 = vmatprep.subr.bf16.mxu0 0
  %151 = vmatpush1.bf16.msra.mxu0 0
  %152 = vmatprep.subr.bf16.mxu0 0
  %153 = vmatpush1.bf16.msra.mxu0 0
  %154 = vmatprep.subr.bf16.mxu0 0
  %155 = vmatpush1.bf16.msra.mxu0 0
  %156 = vmatprep.subr.bf16.mxu0 0
  %157 = vmatpush1.bf16.msra.mxu0 0
  %158 = vmatprep.subr.bf16.mxu0 0
  %159 = vmatpush1.bf16.msra.mxu0 0
  %160 = vmatprep.subr.bf16.mxu0 0
  %161 = vmatpush1.bf16.msra.mxu0 0
  %162 = vmatprep.subr.bf16.mxu0 0
  %163 = vmatpush1.bf16.msra.mxu0 0
  %164 = vmatprep.subr.bf16.mxu0 0
  %165 = vmatpush1.bf16.msra.mxu0 0
  %166 = vmatprep.subr.bf16.mxu0 0
  %167 = vmatpush1.bf16.msra.mxu0 0
  %168 = vmatprep.subr.bf16.mxu0 0
  %169 = vmatpush1.bf16.msra.mxu0 0
  %170 = vmatprep.mubr.bf16.mxu0 0
  %171 = vmatmul.mubr.bf16.gmra.mrb[0].mxu0 %v136
  %v172 = vpop.f32.mrb[0].mxu0
  %v173 = vadd.f32 %v121, %v172
  %v174 = vpop.f32.mrb[0].mxu0
  %v175 = vpop.f32.mrb[0].mxu0
  %v176 = vadd.f32 %v121, %v175
  %v177 = vpop.f32.mrb[0].mxu0
  %178 = vdwg.mxu0
  %v179 = vld [vmem:[%s5] sm:$0xf]
  %v180 = vld [vmem:[%s5 + $0x4] sm:$0xf]
  %v181 = vld [vmem:[%s5 + $0x8] sm:$0xf]
  %v182 = vld [vmem:[%s5 + $0xc] sm:$0xf]
  %v183 = vld [vmem:[%s8] sm:$0x1]
  %v185 = vlaneseq
  %v186 = vshrl.u32 %v185, 7
  %v187 = vsub.s32 0, %v186
  %v188 = vrot.slane %v183, %v187
  %v194 = vunpack.c.l.b16 %v179
  %v195 = vunpack.c.l.b16 %v180
  %v196 = vunpack.c.l.b16 %v181
  %v197 = vunpack.c.l.b16 %v182
  %v198 = vpack.c.b16 %v195, %v194
  %v199 = vpack.c.b16 %v197, %v196
  %202 = vmatprep.subr.bf16.mxu0 0
  %203 = vmatpush1.bf16.msra.mxu0 %v198
  %204 = vmatprep.subr.bf16.mxu0 0
  %205 = vmatpush1.bf16.msra.mxu0 %v199
  %206 = vmatprep.subr.bf16.mxu0 0
  %207 = vmatpush1.bf16.msra.mxu0 0
  %208 = vmatprep.subr.bf16.mxu0 0
  %209 = vmatpush1.bf16.msra.mxu0 0
  %210 = vmatprep.subr.bf16.mxu0 0
  %211 = vmatpush1.bf16.msra.mxu0 0
  %212 = vmatprep.subr.bf16.mxu0 0
  %213 = vmatpush1.bf16.msra.mxu0 0
  %214 = vmatprep.subr.bf16.mxu0 0
  %215 = vmatpush1.bf16.msra.mxu0 0
  %216 = vmatprep.subr.bf16.mxu0 0
  %217 = vmatpush1.bf16.msra.mxu0 0
  %218 = vmatprep.subr.bf16.mxu0 0
  %219 = vmatpush1.bf16.msra.mxu0 0
  %220 = vmatprep.subr.bf16.mxu0 0
  %221 = vmatpush1.bf16.msra.mxu0 0
  %222 = vmatprep.subr.bf16.mxu0 0
  %223 = vmatpush1.bf16.msra.mxu0 0
  %224 = vmatprep.subr.bf16.mxu0 0
  %225 = vmatpush1.bf16.msra.mxu0 0
  %226 = vmatprep.subr.bf16.mxu0 0
  %227 = vmatpush1.bf16.msra.mxu0 0
  %228 = vmatprep.subr.bf16.mxu0 0
  %229 = vmatpush1.bf16.msra.mxu0 0
  %230 = vmatprep.subr.bf16.mxu0 0
  %231 = vmatpush1.bf16.msra.mxu0 0
  %232 = vmatprep.subr.bf16.mxu0 0
  %233 = vmatpush1.bf16.msra.mxu0 0
  %234 = vmatprep.mubr.bf16.mxu0 0
  %235 = vmatmul.mubr.bf16.gmra.mrb[0].mxu0 %v136
  %v236 = vpop.f32.mrb[0].mxu0
  %v237 = vadd.f32 %v188, %v236
  %v238 = vpop.f32.mrb[0].mxu0
  %v239 = vpop.f32.mrb[0].mxu0
  %v240 = vadd.f32 %v188, %v239
  %v241 = vpop.f32.mrb[0].mxu0
  %242 = vdwg.mxu0
  %v243 = vld [vmem:[%s6] sm:$0xf]
  %v244 = vld [vmem:[%s6 + $0x4] sm:$0xf]
  %v245 = vld [vmem:[%s6 + $0x8] sm:$0xf]
  %v246 = vld [vmem:[%s6 + $0xc] sm:$0xf]
  %v247 = vld [vmem:[%s9] sm:$0x1]
  %v249 = vlaneseq
  %v250 = vshrl.u32 %v249, 7
  %v251 = vsub.s32 0, %v250
  %v252 = vrot.slane %v247, %v251
  %v258 = vunpack.c.l.b16 %v243
  %v259 = vunpack.c.l.b16 %v244
  %v260 = vunpack.c.l.b16 %v245
  %v261 = vunpack.c.l.b16 %v246
  %v262 = vpack.c.b16 %v259, %v258
  %v263 = vpack.c.b16 %v261, %v260
  %266 = vmatprep.subr.bf16.mxu0 0
  %267 = vmatpush1.bf16.msra.mxu0 %v262
  %268 = vmatprep.subr.bf16.mxu0 0
  %269 = vmatpush1.bf16.msra.mxu0 %v263
  %270 = vmatprep.subr.bf16.mxu0 0
  %271 = vmatpush1.bf16.msra.mxu0 0
  %272 = vmatprep.subr.bf16.mxu0 0
  %273 = vmatpush1.bf16.msra.mxu0 0
  %274 = vmatprep.subr.bf16.mxu0 0
  %275 = vmatpush1.bf16.msra.mxu0 0
  %276 = vmatprep.subr.bf16.mxu0 0
  %277 = vmatpush1.bf16.msra.mxu0 0
  %278 = vmatprep.subr.bf16.mxu0 0
  %279 = vmatpush1.bf16.msra.mxu0 0
  %280 = vmatprep.subr.bf16.mxu0 0
  %281 = vmatpush1.bf16.msra.mxu0 0
  %282 = vmatprep.subr.bf16.mxu0 0
  %283 = vmatpush1.bf16.msra.mxu0 0
  %284 = vmatprep.subr.bf16.mxu0 0
  %285 = vmatpush1.bf16.msra.mxu0 0
  %286 = vmatprep.subr.bf16.mxu0 0
  %287 = vmatpush1.bf16.msra.mxu0 0
  %288 = vmatprep.subr.bf16.mxu0 0
  %289 = vmatpush1.bf16.msra.mxu0 0
  %290 = vmatprep.subr.bf16.mxu0 0
  %291 = vmatpush1.bf16.msra.mxu0 0
  %292 = vmatprep.subr.bf16.mxu0 0
  %293 = vmatpush1.bf16.msra.mxu0 0
  %294 = vmatprep.subr.bf16.mxu0 0
  %295 = vmatpush1.bf16.msra.mxu0 0
  %296 = vmatprep.subr.bf16.mxu0 0
  %297 = vmatpush1.bf16.msra.mxu0 0
  %298 = vmatprep.mubr.bf16.mxu0 0
  %299 = vmatmul.mubr.bf16.gmra.mrb[0].mxu0 %v136
  %v300 = vpop.f32.mrb[0].mxu0
  %v301 = vadd.f32 %v252, %v300
  %v302 = vpop.f32.mrb[0].mxu0
  %v303 = vpop.f32.mrb[0].mxu0
  %v304 = vadd.f32 %v252, %v303
  %v305 = vpop.f32.mrb[0].mxu0
  %306 = vdwg.mxu0
  %307 = vst.msk [vmem:[%s19] sm:$0xff] %vm67, %v237
  %308 = vst.msk [vmem:[%s19 + $0x8] sm:$0xff] %vm67, %v240
  %309 = vst.msk [vmem:[%s20] sm:$0xff] %vm67, %v301
  %310 = vst.msk [vmem:[%s20 + $0x8] sm:$0xff] %vm67, %v304
  %v311 = vld [vmem:[%s1] sm:$0xff]
  %v312 = vld [vmem:[%s1 + $0x8] sm:$0xff]
  %v313 = vpack.c.bf16 %v176, %v173
  %v314 = vpack.c.bf16 %v240, %v237
  %v315 = vpack.c.bf16 %v304, %v301
  %v316 = vlaneseq
  %v317 = vand.u32 %v316, 127
  %vm318 = vcmp.ge.s32.totalorder %v317, 0
  %vm319 = vcmp.lt.s32.totalorder %v317, 8
  %vm320 = vmand %vm318, %vm319
  %v321 = vsel %vm320, 1, 0
  %v322 = vcvt.s32.f32 %v321
  %v323 = vpack.c.bf16 %v322, %v322
  %v324 = vmul.bf16 %v314, %v323
  %v326 = vsel %vm67, %v313, 0
  %v329 = vsel %vm67, %v324, 0
  %331 = vmatprep.subr.bf16.mxu0 0
  %332 = vmatpush1.bf16.xpose.msra.mxu0 %v329
  %333 = vmatprep.subr.bf16.mxu0 0
  %334 = vmatpush1.bf16.xpose.msra.mxu0 0
  %335 = vmatprep.subr.bf16.mxu0 0
  %336 = vmatpush1.bf16.xpose.msra.mxu0 0
  %337 = vmatprep.subr.bf16.mxu0 0
  %338 = vmatpush1.bf16.xpose.msra.mxu0 0
  %339 = vmatprep.subr.bf16.mxu0 0
  %340 = vmatpush1.bf16.xpose.msra.mxu0 0
  %341 = vmatprep.subr.bf16.mxu0 0
  %342 = vmatpush1.bf16.xpose.msra.mxu0 0
  %343 = vmatprep.subr.bf16.mxu0 0
  %344 = vmatpush1.bf16.xpose.msra.mxu0 0
  %345 = vmatprep.subr.bf16.mxu0 0
  %346 = vmatpush1.bf16.xpose.msra.mxu0 0
  %347 = vmatprep.subr.bf16.mxu0 0
  %348 = vmatpush1.bf16.xpose.msra.mxu0 0
  %349 = vmatprep.subr.bf16.mxu0 0
  %350 = vmatpush1.bf16.xpose.msra.mxu0 0
  %351 = vmatprep.subr.bf16.mxu0 0
  %352 = vmatpush1.bf16.xpose.msra.mxu0 0
  %353 = vmatprep.subr.bf16.mxu0 0
  %354 = vmatpush1.bf16.xpose.msra.mxu0 0
  %355 = vmatprep.subr.bf16.mxu0 0
  %356 = vmatpush1.bf16.xpose.msra.mxu0 0
  %357 = vmatprep.subr.bf16.mxu0 0
  %358 = vmatpush1.bf16.xpose.msra.mxu0 0
  %359 = vmatprep.subr.bf16.mxu0 0
  %360 = vmatpush1.bf16.xpose.msra.mxu0 0
  %361 = vmatprep.subr.bf16.mxu0 0
  %362 = vmatpush1.bf16.xpose.msra.mxu0 0
  %363 = vmatprep.mubr.bf16.mxu0 0
  %364 = vmatmul.mubr.bf16.gmra.mrb[0].mxu0 %v326
  %v365 = vpop.f32.mrb[0].mxu0
  %v366 = vadd.f32 0.0, %v365
  %v367 = vpop.f32.mrb[0].mxu0
  %v368 = vpop.f32.mrb[0].mxu0
  %v369 = vadd.f32 0.0, %v368
  %v370 = vpop.f32.mrb[0].mxu0
  %371 = vdwg.mxu0
  %v372 = vmul.f32 %v366, 0.35355338
  %v373 = vmul.f32 %v369, 0.35355338
  %v374 = vadd.f32 %v372, %v311
  %v375 = vadd.f32 %v373, %v312
  %vm376 = vcmask 130048
  %v377 = vsel %vm376, %v374, -inf
  %378 = vmax.xlane.f32.xlu0 %v377
  %v379 = vpop.xlane.xlu0 %378
  %v380 = vsel %vm376, %v375, -inf
  %381 = vmax.xlane.f32.xlu0 %v380
  %v382 = vpop.xlane.xlu0 %381
  %v383 = vsub.f32 %v374, %v379
  %v384 = vsub.f32 %v375, %v382
  %v385 = vmul.f32 %v383, 1.442695
  %v386 = vpow.pop %v385
  %v387 = vmul.f32 %v384, 1.442695
  %v388 = vpow.pop %v387
  %v389 = vsel %vm376, %v386, 0.0
  %390 = vadd.xlane.f32.xlu0 %v389
  %v391 = vpop.xlane.xlu0 %390
  %v392 = vsel %vm376, %v388, 0.0
  %393 = vadd.xlane.f32.xlu0 %v392
  %v394 = vpop.xlane.xlu0 %393
  %v395 = vrcp.pop %v391
  %v396 = vrcp.pop %v394
  %v397 = vmul.f32 %v386, %v395
  %v398 = vmul.f32 %v388, %v396
  %v399 = vpack.c.bf16 %v398, %v397
  %v400 = vmul.bf16 %v315, %v323
  %vm401 = vcmp.ge.s32.totalorder %v317, 8
  %vm402 = vcmp.lt.s32.totalorder %v317, 16
  %vm403 = vmand %vm401, %vm402
  %v404 = vsel %vm403, 1, 0
  %v405 = vcvt.s32.f32 %v404
  %v406 = vpack.c.bf16 %v405, %v405
  %v407 = vmul.bf16 %v314, %v406
  %v409 = vsel %vm67, %v407, 0
  %411 = vmatprep.subr.bf16.mxu0 0
  %412 = vmatpush1.bf16.xpose.msra.mxu0 %v409
  %413 = vmatprep.subr.bf16.mxu0 0
  %414 = vmatpush1.bf16.xpose.msra.mxu0 0
  %415 = vmatprep.subr.bf16.mxu0 0
  %416 = vmatpush1.bf16.xpose.msra.mxu0 0
  %417 = vmatprep.subr.bf16.mxu0 0
  %418 = vmatpush1.bf16.xpose.msra.mxu0 0
  %419 = vmatprep.subr.bf16.mxu0 0
  %420 = vmatpush1.bf16.xpose.msra.mxu0 0
  %421 = vmatprep.subr.bf16.mxu0 0
  %422 = vmatpush1.bf16.xpose.msra.mxu0 0
  %423 = vmatprep.subr.bf16.mxu0 0
  %424 = vmatpush1.bf16.xpose.msra.mxu0 0
  %425 = vmatprep.subr.bf16.mxu0 0
  %426 = vmatpush1.bf16.xpose.msra.mxu0 0
  %427 = vmatprep.subr.bf16.mxu0 0
  %428 = vmatpush1.bf16.xpose.msra.mxu0 0
  %429 = vmatprep.subr.bf16.mxu0 0
  %430 = vmatpush1.bf16.xpose.msra.mxu0 0
  %431 = vmatprep.subr.bf16.mxu0 0
  %432 = vmatpush1.bf16.xpose.msra.mxu0 0
  %433 = vmatprep.subr.bf16.mxu0 0
  %434 = vmatpush1.bf16.xpose.msra.mxu0 0
  %435 = vmatprep.subr.bf16.mxu0 0
  %436 = vmatpush1.bf16.xpose.msra.mxu0 0
  %437 = vmatprep.subr.bf16.mxu0 0
  %438 = vmatpush1.bf16.xpose.msra.mxu0 0
  %439 = vmatprep.subr.bf16.mxu0 0
  %440 = vmatpush1.bf16.xpose.msra.mxu0 0
  %441 = vmatprep.subr.bf16.mxu0 0
  %442 = vmatpush1.bf16.xpose.msra.mxu0 0
  %443 = vmatprep.mubr.bf16.mxu0 0
  %444 = vmatmul.mubr.bf16.gmra.mrb[0].mxu0 %v326
  %v445 = vpop.f32.mrb[0].mxu0
  %v446 = vadd.f32 0.0, %v445
  %v447 = vpop.f32.mrb[0].mxu0
  %v448 = vpop.f32.mrb[0].mxu0
  %v449 = vadd.f32 0.0, %v448
  %v450 = vpop.f32.mrb[0].mxu0
  %451 = vdwg.mxu0
  %v452 = vmul.f32 %v446, 0.35355338
  %v453 = vmul.f32 %v449, 0.35355338
  %v454 = vadd.f32 %v452, %v311
  %v455 = vadd.f32 %v453, %v312
  %v456 = vsel %vm376, %v454, -inf
  %457 = vmax.xlane.f32.xlu0 %v456
  %v458 = vpop.xlane.xlu0 %457
  %v459 = vsel %vm376, %v455, -inf
  %460 = vmax.xlane.f32.xlu0 %v459
  %v461 = vpop.xlane.xlu0 %460
  %v462 = vsub.f32 %v454, %v458
  %v463 = vsub.f32 %v455, %v461
  %v464 = vmul.f32 %v462, 1.442695
  %v465 = vpow.pop %v464
  %v466 = vmul.f32 %v463, 1.442695
  %v467 = vpow.pop %v466
  %v468 = vsel %vm376, %v465, 0.0
  %469 = vadd.xlane.f32.xlu0 %v468
  %v470 = vpop.xlane.xlu0 %469
  %v471 = vsel %vm376, %v467, 0.0
  %472 = vadd.xlane.f32.xlu0 %v471
  %v473 = vpop.xlane.xlu0 %472
  %v474 = vrcp.pop %v470
  %v475 = vrcp.pop %v473
  %v476 = vmul.f32 %v465, %v474
  %v477 = vmul.f32 %v467, %v475
  %v478 = vpack.c.bf16 %v477, %v476
  %v479 = vmul.bf16 %v315, %v406
  %v481 = vsel %vm376, %v478, 0
  %483 = vmatprep.subr.bf16.mxu0 0
  %484 = vmatpush1.bf16.msra.mxu0 %v479
  %485 = vmatprep.subr.bf16.mxu0 0
  %486 = vmatpush1.bf16.msra.mxu0 0
  %487 = vmatprep.subr.bf16.mxu0 0
  %488 = vmatpush1.bf16.msra.mxu0 0
  %489 = vmatprep.subr.bf16.mxu0 0
  %490 = vmatpush1.bf16.msra.mxu0 0
  %491 = vmatprep.subr.bf16.mxu0 0
  %492 = vmatpush1.bf16.msra.mxu0 0
  %493 = vmatprep.subr.bf16.mxu0 0
  %494 = vmatpush1.bf16.msra.mxu0 0
  %495 = vmatprep.subr.bf16.mxu0 0
  %496 = vmatpush1.bf16.msra.mxu0 0
  %497 = vmatprep.subr.bf16.mxu0 0
  %498 = vmatpush1.bf16.msra.mxu0 0
  %499 = vmatprep.subr.bf16.mxu0 0
  %500 = vmatpush1.bf16.msra.mxu0 0
  %501 = vmatprep.subr.bf16.mxu0 0
  %502 = vmatpush1.bf16.msra.mxu0 0
  %503 = vmatprep.subr.bf16.mxu0 0
  %504 = vmatpush1.bf16.msra.mxu0 0
  %505 = vmatprep.subr.bf16.mxu0 0
  %506 = vmatpush1.bf16.msra.mxu0 0
  %507 = vmatprep.subr.bf16.mxu0 0
  %508 = vmatpush1.bf16.msra.mxu0 0
  %509 = vmatprep.subr.bf16.mxu0 0
  %510 = vmatpush1.bf16.msra.mxu0 0
  %511 = vmatprep.subr.bf16.mxu0 0
  %512 = vmatpush1.bf16.msra.mxu0 0
  %513 = vmatprep.subr.bf16.mxu0 0
  %514 = vmatpush1.bf16.msra.mxu0 0
  %515 = vmatprep.mubr.bf16.mxu0 0
  %516 = vmatmul.mubr.bf16.gmra.mrb[0].mxu0 %v481
  %v517 = vpop.f32.mrb[0].mxu0
  %v518 = vadd.f32 0.0, %v517
  %v519 = vpop.f32.mrb[0].mxu0
  %v520 = vpop.f32.mrb[0].mxu0
  %v521 = vadd.f32 0.0, %v520
  %v522 = vpop.f32.mrb[0].mxu0
  %523 = vdwg.mxu0
  %v525 = vsel %vm376, %v399, 0
  %527 = vmatprep.subr.bf16.mxu0 0
  %528 = vmatpush1.bf16.msra.mxu0 %v400
  %529 = vmatprep.subr.bf16.mxu0 0
  %530 = vmatpush1.bf16.msra.mxu0 0
  %531 = vmatprep.subr.bf16.mxu0 0
  %532 = vmatpush1.bf16.msra.mxu0 0
  %533 = vmatprep.subr.bf16.mxu0 0
  %534 = vmatpush1.bf16.msra.mxu0 0
  %535 = vmatprep.subr.bf16.mxu0 0
  %536 = vmatpush1.bf16.msra.mxu0 0
  %537 = vmatprep.subr.bf16.mxu0 0
  %538 = vmatpush1.bf16.msra.mxu0 0
  %539 = vmatprep.subr.bf16.mxu0 0
  %540 = vmatpush1.bf16.msra.mxu0 0
  %541 = vmatprep.subr.bf16.mxu0 0
  %542 = vmatpush1.bf16.msra.mxu0 0
  %543 = vmatprep.subr.bf16.mxu0 0
  %544 = vmatpush1.bf16.msra.mxu0 0
  %545 = vmatprep.subr.bf16.mxu0 0
  %546 = vmatpush1.bf16.msra.mxu0 0
  %547 = vmatprep.subr.bf16.mxu0 0
  %548 = vmatpush1.bf16.msra.mxu0 0
  %549 = vmatprep.subr.bf16.mxu0 0
  %550 = vmatpush1.bf16.msra.mxu0 0
  %551 = vmatprep.subr.bf16.mxu0 0
  %552 = vmatpush1.bf16.msra.mxu0 0
  %553 = vmatprep.subr.bf16.mxu0 0
  %554 = vmatpush1.bf16.msra.mxu0 0
  %555 = vmatprep.subr.bf16.mxu0 0
  %556 = vmatpush1.bf16.msra.mxu0 0
  %557 = vmatprep.subr.bf16.mxu0 0
  %558 = vmatpush1.bf16.msra.mxu0 0
  %559 = vmatprep.mubr.bf16.mxu0 0
  %560 = vmatmul.mubr.bf16.gmra.mrb[0].mxu0 %v525
  %v561 = vpop.f32.mrb[0].mxu0
  %v562 = vadd.f32 %v518, %v561
  %v563 = vpop.f32.mrb[0].mxu0
  %v564 = vpop.f32.mrb[0].mxu0
  %v565 = vadd.f32 %v521, %v564
  %v566 = vpop.f32.mrb[0].mxu0
  %567 = vdwg.mxu0
  %vm568 = vcmp.ge.s32.totalorder %v317, 16
  %vm569 = vcmp.lt.s32.totalorder %v317, 24
  %vm570 = vmand %vm568, %vm569
  %v571 = vsel %vm570, 1, 0
  %v572 = vcvt.s32.f32 %v571
  %v573 = vpack.c.bf16 %v572, %v572
  %v574 = vmul.bf16 %v314, %v573
  %v576 = vsel %vm67, %v574, 0
  %578 = vmatprep.subr.bf16.mxu0 0
  %579 = vmatpush1.bf16.xpose.msra.mxu0 %v576
  %580 = vmatprep.subr.bf16.mxu0 0
  %581 = vmatpush1.bf16.xpose.msra.mxu0 0
  %582 = vmatprep.subr.bf16.mxu0 0
  %583 = vmatpush1.bf16.xpose.msra.mxu0 0
  %584 = vmatprep.subr.bf16.mxu0 0
  %585 = vmatpush1.bf16.xpose.msra.mxu0 0
  %586 = vmatprep.subr.bf16.mxu0 0
  %587 = vmatpush1.bf16.xpose.msra.mxu0 0
  %588 = vmatprep.subr.bf16.mxu0 0
  %589 = vmatpush1.bf16.xpose.msra.mxu0 0
  %590 = vmatprep.subr.bf16.mxu0 0
  %591 = vmatpush1.bf16.xpose.msra.mxu0 0
  %592 = vmatprep.subr.bf16.mxu0 0
  %593 = vmatpush1.bf16.xpose.msra.mxu0 0
  %594 = vmatprep.subr.bf16.mxu0 0
  %595 = vmatpush1.bf16.xpose.msra.mxu0 0
  %596 = vmatprep.subr.bf16.mxu0 0
  %597 = vmatpush1.bf16.xpose.msra.mxu0 0
  %598 = vmatprep.subr.bf16.mxu0 0
  %599 = vmatpush1.bf16.xpose.msra.mxu0 0
  %600 = vmatprep.subr.bf16.mxu0 0
  %601 = vmatpush1.bf16.xpose.msra.mxu0 0
  %602 = vmatprep.subr.bf16.mxu0 0
  %603 = vmatpush1.bf16.xpose.msra.mxu0 0
  %604 = vmatprep.subr.bf16.mxu0 0
  %605 = vmatpush1.bf16.xpose.msra.mxu0 0
  %606 = vmatprep.subr.bf16.mxu0 0
  %607 = vmatpush1.bf16.xpose.msra.mxu0 0
  %608 = vmatprep.subr.bf16.mxu0 0
  %609 = vmatpush1.bf16.xpose.msra.mxu0 0
  %610 = vmatprep.mubr.bf16.mxu0 0
  %611 = vmatmul.mubr.bf16.gmra.mrb[0].mxu0 %v326
  %v612 = vpop.f32.mrb[0].mxu0
  %v613 = vadd.f32 0.0, %v612
  %v614 = vpop.f32.mrb[0].mxu0
  %v615 = vpop.f32.mrb[0].mxu0
  %v616 = vadd.f32 0.0, %v615
  %v617 = vpop.f32.mrb[0].mxu0
  %618 = vdwg.mxu0
  %v619 = vmul.f32 %v613, 0.35355338
  %v620 = vmul.f32 %v616, 0.35355338
  %v621 = vadd.f32 %v619, %v311
  %v622 = vadd.f32 %v620, %v312
  %v623 = vsel %vm376, %v621, -inf
  %624 = vmax.xlane.f32.xlu0 %v623
  %v625 = vpop.xlane.xlu0 %624
  %v626 = vsel %vm376, %v622, -inf
  %627 = vmax.xlane.f32.xlu0 %v626
  %v628 = vpop.xlane.xlu0 %627
  %v629 = vsub.f32 %v621, %v625
  %v630 = vsub.f32 %v622, %v628
  %v631 = vmul.f32 %v629, 1.442695
  %v632 = vpow.pop %v631
  %v633 = vmul.f32 %v630, 1.442695
  %v634 = vpow.pop %v633
  %v635 = vsel %vm376, %v632, 0.0
  %636 = vadd.xlane.f32.xlu0 %v635
  %v637 = vpop.xlane.xlu0 %636
  %v638 = vsel %vm376, %v634, 0.0
  %639 = vadd.xlane.f32.xlu0 %v638
  %v640 = vpop.xlane.xlu0 %639
  %v641 = vrcp.pop %v637
  %v642 = vrcp.pop %v640
  %v643 = vmul.f32 %v632, %v641
  %v644 = vmul.f32 %v634, %v642
  %v645 = vpack.c.bf16 %v644, %v643
  %v646 = vmul.bf16 %v315, %v573
  %v648 = vsel %vm376, %v645, 0
  %650 = vmatprep.subr.bf16.mxu0 0
  %651 = vmatpush1.bf16.msra.mxu0 %v646
  %652 = vmatprep.subr.bf16.mxu0 0
  %653 = vmatpush1.bf16.msra.mxu0 0
  %654 = vmatprep.subr.bf16.mxu0 0
  %655 = vmatpush1.bf16.msra.mxu0 0
  %656 = vmatprep.subr.bf16.mxu0 0
  %657 = vmatpush1.bf16.msra.mxu0 0
  %658 = vmatprep.subr.bf16.mxu0 0
  %659 = vmatpush1.bf16.msra.mxu0 0
  %660 = vmatprep.subr.bf16.mxu0 0
  %661 = vmatpush1.bf16.msra.mxu0 0
  %662 = vmatprep.subr.bf16.mxu0 0
  %663 = vmatpush1.bf16.msra.mxu0 0
  %664 = vmatprep.subr.bf16.mxu0 0
  %665 = vmatpush1.bf16.msra.mxu0 0
  %666 = vmatprep.subr.bf16.mxu0 0
  %667 = vmatpush1.bf16.msra.mxu0 0
  %668 = vmatprep.subr.bf16.mxu0 0
  %669 = vmatpush1.bf16.msra.mxu0 0
  %670 = vmatprep.subr.bf16.mxu0 0
  %671 = vmatpush1.bf16.msra.mxu0 0
  %672 = vmatprep.subr.bf16.mxu0 0
  %673 = vmatpush1.bf16.msra.mxu0 0
  %674 = vmatprep.subr.bf16.mxu0 0
  %675 = vmatpush1.bf16.msra.mxu0 0
  %676 = vmatprep.subr.bf16.mxu0 0
  %677 = vmatpush1.bf16.msra.mxu0 0
  %678 = vmatprep.subr.bf16.mxu0 0
  %679 = vmatpush1.bf16.msra.mxu0 0
  %680 = vmatprep.subr.bf16.mxu0 0
  %681 = vmatpush1.bf16.msra.mxu0 0
  %682 = vmatprep.mubr.bf16.mxu0 0
  %683 = vmatmul.mubr.bf16.gmra.mrb[0].mxu0 %v648
  %v684 = vpop.f32.mrb[0].mxu0
  %v685 = vadd.f32 0.0, %v684
  %v686 = vpop.f32.mrb[0].mxu0
  %v687 = vpop.f32.mrb[0].mxu0
  %v688 = vadd.f32 0.0, %v687
  %v689 = vpop.f32.mrb[0].mxu0
  %690 = vdwg.mxu0
  %v691 = vadd.f32 %v562, %v685
  %v692 = vadd.f32 %v565, %v688
  %vm693 = vcmp.ge.s32.totalorder %v317, 24
  %vm694 = vcmp.lt.s32.totalorder %v317, 32
  %vm695 = vmand %vm693, %vm694
  %v696 = vsel %vm695, 1, 0
  %v697 = vcvt.s32.f32 %v696
  %v698 = vpack.c.bf16 %v697, %v697
  %v699 = vmul.bf16 %v314, %v698
  %v701 = vsel %vm67, %v699, 0
  %703 = vmatprep.subr.bf16.mxu0 0
  %704 = vmatpush1.bf16.xpose.msra.mxu0 %v701
  %705 = vmatprep.subr.bf16.mxu0 0
  %706 = vmatpush1.bf16.xpose.msra.mxu0 0
  %707 = vmatprep.subr.bf16.mxu0 0
  %708 = vmatpush1.bf16.xpose.msra.mxu0 0
  %709 = vmatprep.subr.bf16.mxu0 0
  %710 = vmatpush1.bf16.xpose.msra.mxu0 0
  %711 = vmatprep.subr.bf16.mxu0 0
  %712 = vmatpush1.bf16.xpose.msra.mxu0 0
  %713 = vmatprep.subr.bf16.mxu0 0
  %714 = vmatpush1.bf16.xpose.msra.mxu0 0
  %715 = vmatprep.subr.bf16.mxu0 0
  %716 = vmatpush1.bf16.xpose.msra.mxu0 0
  %717 = vmatprep.subr.bf16.mxu0 0
  %718 = vmatpush1.bf16.xpose.msra.mxu0 0
  %719 = vmatprep.subr.bf16.mxu0 0
  %720 = vmatpush1.bf16.xpose.msra.mxu0 0
  %721 = vmatprep.subr.bf16.mxu0 0
  %722 = vmatpush1.bf16.xpose.msra.mxu0 0
  %723 = vmatprep.subr.bf16.mxu0 0
  %724 = vmatpush1.bf16.xpose.msra.mxu0 0
  %725 = vmatprep.subr.bf16.mxu0 0
  %726 = vmatpush1.bf16.xpose.msra.mxu0 0
  %727 = vmatprep.subr.bf16.mxu0 0
  %728 = vmatpush1.bf16.xpose.msra.mxu0 0
  %729 = vmatprep.subr.bf16.mxu0 0
  %730 = vmatpush1.bf16.xpose.msra.mxu0 0
  %731 = vmatprep.subr.bf16.mxu0 0
  %732 = vmatpush1.bf16.xpose.msra.mxu0 0
  %733 = vmatprep.subr.bf16.mxu0 0
  %734 = vmatpush1.bf16.xpose.msra.mxu0 0
  %735 = vmatprep.mubr.bf16.mxu0 0
  %736 = vmatmul.mubr.bf16.gmra.mrb[0].mxu0 %v326
  %v737 = vpop.f32.mrb[0].mxu0
  %v738 = vadd.f32 0.0, %v737
  %v739 = vpop.f32.mrb[0].mxu0
  %v740 = vpop.f32.mrb[0].mxu0
  %v741 = vadd.f32 0.0, %v740
  %v742 = vpop.f32.mrb[0].mxu0
  %743 = vdwg.mxu0
  %v744 = vmul.f32 %v738, 0.35355338
  %v745 = vmul.f32 %v741, 0.35355338
  %v746 = vadd.f32 %v744, %v311
  %v747 = vadd.f32 %v745, %v312
  %v748 = vsel %vm376, %v746, -inf
  %749 = vmax.xlane.f32.xlu0 %v748
  %v750 = vpop.xlane.xlu0 %749
  %v751 = vsel %vm376, %v747, -inf
  %752 = vmax.xlane.f32.xlu0 %v751
  %v753 = vpop.xlane.xlu0 %752
  %v754 = vsub.f32 %v746, %v750
  %v755 = vsub.f32 %v747, %v753
  %v756 = vmul.f32 %v754, 1.442695
  %v757 = vpow.pop %v756
  %v758 = vmul.f32 %v755, 1.442695
  %v759 = vpow.pop %v758
  %v760 = vsel %vm376, %v757, 0.0
  %761 = vadd.xlane.f32.xlu0 %v760
  %v762 = vpop.xlane.xlu0 %761
  %v763 = vsel %vm376, %v759, 0.0
  %764 = vadd.xlane.f32.xlu0 %v763
  %v765 = vpop.xlane.xlu0 %764
  %v766 = vrcp.pop %v762
  %v767 = vrcp.pop %v765
  %v768 = vmul.f32 %v757, %v766
  %v769 = vmul.f32 %v759, %v767
  %v770 = vpack.c.bf16 %v769, %v768
  %v771 = vmul.bf16 %v315, %v698
  %v773 = vsel %vm376, %v770, 0
  %775 = vmatprep.subr.bf16.mxu0 0
  %776 = vmatpush1.bf16.msra.mxu0 %v771
  %777 = vmatprep.subr.bf16.mxu0 0
  %778 = vmatpush1.bf16.msra.mxu0 0
  %779 = vmatprep.subr.bf16.mxu0 0
  %780 = vmatpush1.bf16.msra.mxu0 0
  %781 = vmatprep.subr.bf16.mxu0 0
  %782 = vmatpush1.bf16.msra.mxu0 0
  %783 = vmatprep.subr.bf16.mxu0 0
  %784 = vmatpush1.bf16.msra.mxu0 0
  %785 = vmatprep.subr.bf16.mxu0 0
  %786 = vmatpush1.bf16.msra.mxu0 0
  %787 = vmatprep.subr.bf16.mxu0 0
  %788 = vmatpush1.bf16.msra.mxu0 0
  %789 = vmatprep.subr.bf16.mxu0 0
  %790 = vmatpush1.bf16.msra.mxu0 0
  %791 = vmatprep.subr.bf16.mxu0 0
  %792 = vmatpush1.bf16.msra.mxu0 0
  %793 = vmatprep.subr.bf16.mxu0 0
  %794 = vmatpush1.bf16.msra.mxu0 0
  %795 = vmatprep.subr.bf16.mxu0 0
  %796 = vmatpush1.bf16.msra.mxu0 0
  %797 = vmatprep.subr.bf16.mxu0 0
  %798 = vmatpush1.bf16.msra.mxu0 0
  %799 = vmatprep.subr.bf16.mxu0 0
  %800 = vmatpush1.bf16.msra.mxu0 0
  %801 = vmatprep.subr.bf16.mxu0 0
  %802 = vmatpush1.bf16.msra.mxu0 0
  %803 = vmatprep.subr.bf16.mxu0 0
  %804 = vmatpush1.bf16.msra.mxu0 0
  %805 = vmatprep.subr.bf16.mxu0 0
  %806 = vmatpush1.bf16.msra.mxu0 0
  %807 = vmatprep.mubr.bf16.mxu0 0
  %808 = vmatmul.mubr.bf16.gmra.mrb[0].mxu0 %v773
  %v809 = vpop.f32.mrb[0].mxu0
  %v810 = vadd.f32 0.0, %v809
  %v811 = vpop.f32.mrb[0].mxu0
  %v812 = vpop.f32.mrb[0].mxu0
  %v813 = vadd.f32 0.0, %v812
  %v814 = vpop.f32.mrb[0].mxu0
  %815 = vdwg.mxu0
  %v816 = vadd.f32 %v691, %v810
  %v817 = vadd.f32 %v692, %v813
  %v818 = vpack.c.bf16 %v817, %v816
  %v819 = vld [vmem:[%s10] sm:$0xf]
  %v820 = vld [vmem:[%s10 + $0x4] sm:$0xf]
  %v821 = vld [vmem:[%s10 + $0x8] sm:$0xf]
  %v822 = vld [vmem:[%s10 + $0xc] sm:$0xf]
  %v823 = vld [vmem:[%s11] sm:$0x1]
  %v825 = vlaneseq
  %v826 = vshrl.u32 %v825, 7
  %v827 = vsub.s32 0, %v826
  %v828 = vrot.slane %v823, %v827
  %v834 = vunpack.c.l.b16 %v819
  %v835 = vunpack.c.l.b16 %v820
  %v836 = vunpack.c.l.b16 %v821
  %v837 = vunpack.c.l.b16 %v822
  %v838 = vpack.c.b16 %v835, %v834
  %v839 = vpack.c.b16 %v837, %v836
  %v843 = vsel %vm67, %v818, 0
  %845 = vmatprep.subr.bf16.mxu0 0
  %846 = vmatpush1.bf16.msra.mxu0 %v838
  %847 = vmatprep.subr.bf16.mxu0 0
  %848 = vmatpush1.bf16.msra.mxu0 %v839
  %849 = vmatprep.subr.bf16.mxu0 0
  %850 = vmatpush1.bf16.msra.mxu0 0
  %851 = vmatprep.subr.bf16.mxu0 0
  %852 = vmatpush1.bf16.msra.mxu0 0
  %853 = vmatprep.subr.bf16.mxu0 0
  %854 = vmatpush1.bf16.msra.mxu0 0
  %855 = vmatprep.subr.bf16.mxu0 0
  %856 = vmatpush1.bf16.msra.mxu0 0
  %857 = vmatprep.subr.bf16.mxu0 0
  %858 = vmatpush1.bf16.msra.mxu0 0
  %859 = vmatprep.subr.bf16.mxu0 0
  %860 = vmatpush1.bf16.msra.mxu0 0
  %861 = vmatprep.subr.bf16.mxu0 0
  %862 = vmatpush1.bf16.msra.mxu0 0
  %863 = vmatprep.subr.bf16.mxu0 0
  %864 = vmatpush1.bf16.msra.mxu0 0
  %865 = vmatprep.subr.bf16.mxu0 0
  %866 = vmatpush1.bf16.msra.mxu0 0
  %867 = vmatprep.subr.bf16.mxu0 0
  %868 = vmatpush1.bf16.msra.mxu0 0
  %869 = vmatprep.subr.bf16.mxu0 0
  %870 = vmatpush1.bf16.msra.mxu0 0
  %871 = vmatprep.subr.bf16.mxu0 0
  %872 = vmatpush1.bf16.msra.mxu0 0
  %873 = vmatprep.subr.bf16.mxu0 0
  %874 = vmatpush1.bf16.msra.mxu0 0
  %875 = vmatprep.subr.bf16.mxu0 0
  %876 = vmatpush1.bf16.msra.mxu0 0
  %877 = vmatprep.mubr.bf16.mxu0 0
  %878 = vmatmul.mubr.bf16.gmra.mrb[0].mxu0 %v843
  %v879 = vpop.f32.mrb[0].mxu0
  %v880 = vadd.f32 %v828, %v879
  %v881 = vpop.f32.mrb[0].mxu0
  %v882 = vpop.f32.mrb[0].mxu0
  %v883 = vadd.f32 %v828, %v882
  %v884 = vpop.f32.mrb[0].mxu0
  %885 = vdwg.mxu0
  %v886 = vadd.f32 %v63, %v880
  %v887 = vadd.f32 %v64, %v883
  %v888 = vld [vmem:[%s12] sm:$0x1]
  %v889 = vld [vmem:[%s13] sm:$0x1]
  %v890 = vsel %vm67, %v886, 0.0
  %891 = vadd.xlane.f32.xlu0 %v890
  %v892 = vpop.xlane.xlu0 %891
  %v893 = vsel %vm67, %v887, 0.0
  %894 = vadd.xlane.f32.xlu0 %v893
  %v895 = vpop.xlane.xlu0 %894
  %v896 = vmul.f32 %v892, %v74
  %v897 = vmul.f32 %v895, %v74
  %v898 = vsub.f32 %v886, %v896
  %v899 = vsub.f32 %v887, %v897
  %v900 = vmul.f32 %v898, %v898
  %v901 = vmul.f32 %v899, %v899
  %v902 = vsel %vm67, %v900, 0.0
  %903 = vadd.xlane.f32.xlu0 %v902
  %v904 = vpop.xlane.xlu0 %903
  %v905 = vsel %vm67, %v901, 0.0
  %906 = vadd.xlane.f32.xlu0 %v905
  %v907 = vpop.xlane.xlu0 %906
  %v908 = vmul.f32 %v904, %v74
  %v909 = vmul.f32 %v907, %v74
  %v910 = vadd.f32 %v908, 1e-05
  %v911 = vadd.f32 %v909, 1e-05
  %v912 = vrsqrt.pop %v910
  %v913 = vrsqrt.pop %v911
  %v914 = vmul.f32 %v898, %v912
  %v915 = vmul.f32 %v899, %v913
  %v917 = vlaneseq
  %v918 = vshrl.u32 %v917, 7
  %v919 = vsub.s32 0, %v918
  %v920 = vrot.slane %v888, %v919
  %v922 = vmul.f32 %v914, %v920
  %v923 = vmul.f32 %v915, %v920
  %v925 = vlaneseq
  %v926 = vshrl.u32 %v925, 7
  %v927 = vsub.s32 0, %v926
  %v928 = vrot.slane %v889, %v927
  %v930 = vadd.f32 %v922, %v928
  %v931 = vadd.f32 %v923, %v928
  %v932 = vpack.c.bf16 %v931, %v930
  %v933 = vld [vmem:[%s14] sm:$0xf]
  %v934 = vld [vmem:[%s14 + $0x4] sm:$0xf]
  %v935 = vld [vmem:[%s14 + $0x8] sm:$0xf]
  %v936 = vld [vmem:[%s14 + $0xc] sm:$0xf]
  %v937 = vld [vmem:[%s15] sm:$0x1]
  %v939 = vlaneseq
  %v940 = vshrl.u32 %v939, 7
  %v941 = vsub.s32 0, %v940
  %v942 = vrot.slane %v937, %v941
  %v948 = vunpack.c.l.b16 %v933
  %v949 = vunpack.c.l.b16 %v934
  %v950 = vunpack.c.l.b16 %v935
  %v951 = vunpack.c.l.b16 %v936
  %v952 = vpack.c.b16 %v949, %v948
  %v953 = vpack.c.b16 %v951, %v950
  %v957 = vsel %vm67, %v932, 0
  %959 = vmatprep.subr.bf16.mxu0 0
  %960 = vmatpush1.bf16.msra.mxu0 %v952
  %961 = vmatprep.subr.bf16.mxu0 0
  %962 = vmatpush1.bf16.msra.mxu0 %v953
  %963 = vmatprep.subr.bf16.mxu0 0
  %964 = vmatpush1.bf16.msra.mxu0 0
  %965 = vmatprep.subr.bf16.mxu0 0
  %966 = vmatpush1.bf16.msra.mxu0 0
  %967 = vmatprep.subr.bf16.mxu0 0
  %968 = vmatpush1.bf16.msra.mxu0 0
  %969 = vmatprep.subr.bf16.mxu0 0
  %970 = vmatpush1.bf16.msra.mxu0 0
  %971 = vmatprep.subr.bf16.mxu0 0
  %972 = vmatpush1.bf16.msra.mxu0 0
  %973 = vmatprep.subr.bf16.mxu0 0
  %974 = vmatpush1.bf16.msra.mxu0 0
  %975 = vmatprep.subr.bf16.mxu0 0
  %976 = vmatpush1.bf16.msra.mxu0 0
  %977 = vmatprep.subr.bf16.mxu0 0
  %978 = vmatpush1.bf16.msra.mxu0 0
  %979 = vmatprep.subr.bf16.mxu0 0
  %980 = vmatpush1.bf16.msra.mxu0 0
  %981 = vmatprep.subr.bf16.mxu0 0
  %982 = vmatpush1.bf16.msra.mxu0 0
  %983 = vmatprep.subr.bf16.mxu0 0
  %984 = vmatpush1.bf16.msra.mxu0 0
  %985 = vmatprep.subr.bf16.mxu0 0
  %986 = vmatpush1.bf16.msra.mxu0 0
  %987 = vmatprep.subr.bf16.mxu0 0
  %988 = vmatpush1.bf16.msra.mxu0 0
  %989 = vmatprep.subr.bf16.mxu0 0
  %990 = vmatpush1.bf16.msra.mxu0 0
  %991 = vmatprep.mubr.bf16.mxu0 0
  %992 = vmatmul.mubr.bf16.gmra.mrb[0].mxu0 %v957
  %v993 = vpop.f32.mrb[0].mxu0
  %v994 = vadd.f32 %v942, %v993
  %v995 = vpop.f32.mrb[0].mxu0
  %v996 = vpop.f32.mrb[0].mxu0
  %v997 = vadd.f32 %v942, %v996
  %v998 = vpop.f32.mrb[0].mxu0
  %999 = vdwg.mxu0
  %v1000 = vmul.f32 %v994, 0.5
  %v1001 = vmul.f32 %v997, 0.5
  %v1002 = vmul.f32 %v994, 0.044715
  %v1003 = vmul.f32 %v997, 0.044715
  %v1004 = vmul.f32 %v1002, %v994
  %v1005 = vmul.f32 %v1003, %v997
  %v1006 = vmul.f32 %v1004, %v994
  %v1007 = vmul.f32 %v1005, %v997
  %v1008 = vadd.f32 %v994, %v1006
  %v1009 = vadd.f32 %v997, %v1007
  %v1010 = vmul.f32 %v1008, 0.7978846
  %v1011 = vmul.f32 %v1009, 0.7978846
  %v1012 = vtanh.pop %v1010
  %v1013 = vtanh.pop %v1011
  %v1014 = vadd.f32 %v1012, 1.0
  %v1015 = vadd.f32 %v1013, 1.0
  %v1016 = vmul.f32 %v1000, %v1014
  %v1017 = vmul.f32 %v1001, %v1015
  %v1018 = vpack.c.bf16 %v1017, %v1016
  %v1019 = vld [vmem:[%s16] sm:$0xf]
  %v1020 = vld [vmem:[%s16 + $0x4] sm:$0xf]
  %v1021 = vld [vmem:[%s16 + $0x8] sm:$0xf]
  %v1022 = vld [vmem:[%s16 + $0xc] sm:$0xf]
  %v1023 = vld [vmem:[%s16 + $0x10] sm:$0xf]
  %v1024 = vld [vmem:[%s16 + $0x14] sm:$0xf]
  %v1025 = vld [vmem:[%s16 + $0x18] sm:$0xf]
  %v1026 = vld [vmem:[%s16 + $0x1c] sm:$0xf]
  %v1027 = vld [vmem:[%s16 + $0x20] sm:$0xf]
  %v1028 = vld [vmem:[%s16 + $0x24] sm:$0xf]
  %v1029 = vld [vmem:[%s16 + $0x28] sm:$0xf]
  %v1030 = vld [vmem:[%s16 + $0x2c] sm:$0xf]
  %v1031 = vld [vmem:[%s16 + $0x30] sm:$0xf]
  %v1032 = vld [vmem:[%s16 + $0x34] sm:$0xf]
  %v1033 = vld [vmem:[%s16 + $0x38] sm:$0xf]
  %v1034 = vld [vmem:[%s16 + $0x3c] sm:$0xf]
  %v1035 = vld [vmem:[%s17] sm:$0x1]
  %v1037 = vlaneseq
  %v1038 = vshrl.u32 %v1037, 7
  %v1039 = vsub.s32 0, %v1038
  %v1040 = vrot.slane %v1035, %v1039
  %v1058 = vunpack.c.l.b16 %v1019
  %v1059 = vunpack.c.l.b16 %v1020
  %v1060 = vunpack.c.l.b16 %v1021
  %v1061 = vunpack.c.l.b16 %v1022
  %v1062 = vunpack.c.l.b16 %v1023
  %v1063 = vunpack.c.l.b16 %v1024
  %v1064 = vunpack.c.l.b16 %v1025
  %v1065 = vunpack.c.l.b16 %v1026
  %v1066 = vunpack.c.l.b16 %v1027
  %v1067 = vunpack.c.l.b16 %v1028
  %v1068 = vunpack.c.l.b16 %v1029
  %v1069 = vunpack.c.l.b16 %v1030
  %v1070 = vunpack.c.l.b16 %v1031
  %v1071 = vunpack.c.l.b16 %v1032
  %v1072 = vunpack.c.l.b16 %v1033
  %v1073 = vunpack.c.l.b16 %v1034
  %v1074 = vpack.c.b16 %v1059, %v1058
  %v1075 = vpack.c.b16 %v1061, %v1060
  %v1076 = vpack.c.b16 %v1063, %v1062
  %v1077 = vpack.c.b16 %v1065, %v1064
  %v1078 = vpack.c.b16 %v1067, %v1066
  %v1079 = vpack.c.b16 %v1069, %v1068
  %v1080 = vpack.c.b16 %v1071, %v1070
  %v1081 = vpack.c.b16 %v1073, %v1072
  %1090 = vmatprep.subr.bf16.mxu0 0
  %1091 = vmatpush1.bf16.msra.mxu0 %v1074
  %1092 = vmatprep.subr.bf16.mxu0 0
  %1093 = vmatpush1.bf16.msra.mxu0 %v1075
  %1094 = vmatprep.subr.bf16.mxu0 0
  %1095 = vmatpush1.bf16.msra.mxu0 %v1076
  %1096 = vmatprep.subr.bf16.mxu0 0
  %1097 = vmatpush1.bf16.msra.mxu0 %v1077
  %1098 = vmatprep.subr.bf16.mxu0 0
  %1099 = vmatpush1.bf16.msra.mxu0 %v1078
  %1100 = vmatprep.subr.bf16.mxu0 0
  %1101 = vmatpush1.bf16.msra.mxu0 %v1079
  %1102 = vmatprep.subr.bf16.mxu0 0
  %1103 = vmatpush1.bf16.msra.mxu0 %v1080
  %1104 = vmatprep.subr.bf16.mxu0 0
  %1105 = vmatpush1.bf16.msra.mxu0 %v1081
  %1106 = vmatprep.subr.bf16.mxu0 0
  %1107 = vmatpush1.bf16.msra.mxu0 0
  %1108 = vmatprep.subr.bf16.mxu0 0
  %1109 = vmatpush1.bf16.msra.mxu0 0
  %1110 = vmatprep.subr.bf16.mxu0 0
  %1111 = vmatpush1.bf16.msra.mxu0 0
  %1112 = vmatprep.subr.bf16.mxu0 0
  %1113 = vmatpush1.bf16.msra.mxu0 0
  %1114 = vmatprep.subr.bf16.mxu0 0
  %1115 = vmatpush1.bf16.msra.mxu0 0
  %1116 = vmatprep.subr.bf16.mxu0 0
  %1117 = vmatpush1.bf16.msra.mxu0 0
  %1118 = vmatprep.subr.bf16.mxu0 0
  %1119 = vmatpush1.bf16.msra.mxu0 0
  %1120 = vmatprep.subr.bf16.mxu0 0
  %1121 = vmatpush1.bf16.msra.mxu0 0
  %1122 = vmatprep.mubr.bf16.mxu0 0
  %1123 = vmatmul.mubr.bf16.gmra.mrb[0].mxu0 %v1018
  %v1124 = vpop.f32.mrb[0].mxu0
  %v1125 = vadd.f32 %v1040, %v1124
  %v1126 = vpop.f32.mrb[0].mxu0
  %v1127 = vpop.f32.mrb[0].mxu0
  %v1128 = vadd.f32 %v1040, %v1127
  %v1129 = vpop.f32.mrb[0].mxu0
  %1130 = vdwg.mxu0
  %v1131 = vadd.f32 %v886, %v1125
  %v1132 = vadd.f32 %v887, %v1128
  %1133 = vst.msk [vmem:[%s18] sm:$0xff] %vm67, %v1131
  %1134 = vst.msk [vmem:[%s18 + $0x8] sm:$0xff] %vm67, %v1132
  // Predicated region
  $region74: #{_lambda_.3} parent=0 // pred_check
    _
  $region75: #{_lambda_.3} parent=0 // pred_check_branch
    %1136 = sbr.rel (0) target = $region77
  $region76: #{_lambda_.3} parent=0 // pred_region
    _
  $region77: #{_lambda_.3} parent=0 // pred_fallthru
    _
  // Predicated region
  $region78: #{_lambda_.3} parent=0 // pred_check
    _
  $region79: #{_lambda_.3} parent=0 // pred_check_branch
    %1138 = sbr.rel (0) target = $region81
  $region80: #{_lambda_.3} parent=0 // pred_region
    _
  $region81: #{_lambda_.3} parent=0 // pred_fallthru
    _
  // Predicated region
  $region82: #{_lambda_.3} parent=0 // pred_check
    _
  $region83: #{_lambda_.3} parent=0 // pred_check_branch
    %1140 = sbr.rel (0) target = $region85
  $region84: #{_lambda_.3} parent=0 // pred_region
    _
  $region85: #{_lambda_.3} parent=0 // pred_fallthru
    _
  // Predicated region
  $region86: #{_lambda_.3} parent=0 // pred_check
    _
  $region87: #{_lambda_.3} parent=0 // pred_check_branch
    %1142 = sbr.rel (0) target = $region89
  $region88: #{_lambda_.3} parent=0 // pred_region
    _
  $region89: #{_lambda_.3} parent=0 // pred_fallthru
    _
  // Predicated region
  $region90: #{_lambda_.3} parent=0 // pred_check
    _
  $region91: #{_lambda_.3} parent=0 // pred_check_branch
    %1144 = sbr.rel (0) target = $region93
  $region92: #{_lambda_.3} parent=0 // pred_region
    _
  $region93: #{_lambda_.3} parent=0 // pred_fallthru
    _
  // Predicated region
  $region94: #{_lambda_.3} parent=0 // pred_check
    _
  $region95: #{_lambda_.3} parent=0 // pred_check_branch
    %1146 = sbr.rel (0) target = $region97
  $region96: #{_lambda_.3} parent=0 // pred_region
    _
  $region97: #{_lambda_.3} parent=0 // pred_fallthru
    _

</llo_original>
